<compile_context>
chip_gen: v6e
topology: v6e:2x2x1
jax: 0.10.0
libtpu: 0.0.40
codegen_flags: <defaults>
</compile_context>

<pallas_src>
import functools
import math

import jax
import jax.numpy as jnp
from jax import lax
from jax.experimental import pallas as pl
from jax.experimental.pallas import tpu as pltpu

BN_EPS = 1e-5
LANES = 128
SUB = 16  # bf16 sublane packing


def _round_up(x, m):
    return (x + m - 1) // m * m


def _conv_stats_kernel(x_ref, halo_ref, w_ref, y_ref, sum_ref, sq_ref, patch_ref,
                       *, KH, KW, Wp, Wo, R):
    """Conv2d (one big-K MXU matmul over an in-VMEM im2col patch) + masked
    per-channel sum / sum-of-squares partials for BatchNorm, for one
    (image, row-tile, cout-tile) grid point."""
    t = pl.program_id(1)
    c = pl.program_id(2)
    TM = x_ref.shape[1]

    # Build the im2col patch once per row tile (first cout tile only).
    @pl.when(c == 0)
    def _():
        # TM "current" rows + the halo_pad rows the shifted taps reach into.
        slab = jnp.concatenate([x_ref[0], halo_ref[0]], axis=0)   # (TM+halo, Cin) bf16
        taps = [slab[ky * Wp + kx: ky * Wp + kx + TM, :]
                for ky in range(KH) for kx in range(KW)]
        patch_ref[...] = jnp.concatenate(taps, axis=1)            # (TM, KH*KW*Cin)

    acc = jnp.dot(patch_ref[...], w_ref[...],
                  preferred_element_type=jnp.float32)             # (TM, TC) f32
    y_ref[0] = acc.astype(y_ref.dtype)

    # Validity mask built in-kernel (no HBM mask stream): wide row r is a real
    # output iff r < R and (r mod Wp) < Wo.  The mod is done via f32 divide +
    # truncation (exact for these magnitudes) to avoid vector integer division.
    rows = t * TM + lax.broadcasted_iota(jnp.int32, (TM, 1), 0)
    q = (rows.astype(jnp.float32) / float(Wp)).astype(jnp.int32)  # trunc == floor, r >= 0
    col = rows - q * Wp
    mask = (jnp.logical_and(col < Wo, rows < R)).astype(jnp.float32)
    accv = acc * mask                                             # (TM, TC) * (TM, 1)
    sum_ref[0, 0] = jnp.sum(accv, axis=0, keepdims=True)
    sq_ref[0, 0] = jnp.sum(accv * accv, axis=0, keepdims=True)


def conv_block_forward(x_nchw, w, b, gamma, beta, *, padding=1,
                       with_nonlinearity=True, row_block=1024, cout_block=256):
    """x: (N, Cin, H, W); w: (Cout, Cin, KH, KW); b/gamma/beta: (Cout,). NCHW f32 out."""
    del b  # conv bias cancels exactly under training-mode (mean-subtracted) BatchNorm
    N, Cin, H, W = x_nchw.shape
    Cout, _, KH, KW = w.shape
    # TODO(synk): stride > 1 / asymmetric padding not implemented (module default stride=1).
    Ho = H + 2 * padding - KH + 1
    Wo = W + 2 * padding - KW + 1
    Hp, Wp = H + 2 * padding, W + 2 * padding

    Cpad = _round_up(Cout, LANES)                       # lane-dense output channels
    TC = min(Cpad, _round_up(cout_block, LANES))
    TC = math.gcd(Cpad, TC)                             # TC | Cpad, multiple of 128
    n_ctiles = Cpad // TC

    halo = (KH - 1) * Wp + (KW - 1)                     # flat-row reach of the conv taps
    halo_pad = max(SUB, _round_up(halo, SUB))

    R = Ho * Wp                                         # "wide" output rows per image
    TM = _round_up(max(min(row_block, R), halo_pad), halo_pad)
    n_tiles = pl.cdiv(R, TM)
    # v7x has 2 TensorCores: keep >= 2 reasonably balanced parallel work units.
    if N * n_tiles < 2 and R > halo_pad:
        TM = _round_up(pl.cdiv(R, 2), halo_pad)
        n_tiles = pl.cdiv(R, TM)
    R_pad = n_tiles * TM
    halo_stride = TM // halo_pad
    Kdim = KH * KW * Cin

    # --- layout glue (one fused XLA copy over the input): NCHW -> padded NHWC
    # flattened to "wide" rows (one row per (h, w) of the padded width Wp), bf16.
    # TODO(synk): the spatial zero-pad could be folded into the kernel to save a copy.
    x = jnp.transpose(x_nchw, (0, 2, 3, 1))
    xp = jnp.pad(x, ((0, 0), (padding, padding), (padding, padding), (0, 0)))
    xflat = xp.reshape(N, Hp * Wp, Cin).astype(jnp.bfloat16)
    xflat = jnp.pad(xflat, ((0, 0), (0, R_pad + halo_pad - Hp * Wp), (0, 0)))

    # Weights: (Cout, Cin, KH, KW) -> (KH*KW*Cin, Cpad) bf16 matching the patch layout.
    w_k = jnp.transpose(w, (2, 3, 1, 0)).reshape(Kdim, Cout)
    w_k = jnp.pad(w_k, ((0, 0), (0, Cpad - Cout))).astype(jnp.bfloat16)

    # Explicit VMEM budget (double-buffered blocks + scratch + accumulator).
    step_bytes = (2 * TM * Cin * 2 + 2 * halo_pad * Cin * 2 + 2 * Kdim * TC * 2
                  + 2 * TM * TC * 2 + TM * Kdim * 2 + TM * TC * 4 + 8 * TC * 4)
    vmem_limit = int(min(48 * 2 ** 20, max(16 * 2 ** 20, 3 * step_bytes)))

    kernel = functools.partial(_conv_stats_kernel, KH=KH, KW=KW, Wp=Wp, Wo=Wo, R=R)

    conv_wide, ssum, ssq = pl.pallas_call(
        kernel,
        out_shape=(
            jax.ShapeDtypeStruct((N, R_pad, Cpad), jnp.bfloat16),   # conv output (bf16)
            jax.ShapeDtypeStruct((N, n_tiles, 1, Cpad), jnp.float32),
            jax.ShapeDtypeStruct((N, n_tiles, 1, Cpad), jnp.float32),
        ),
        grid=(N, n_tiles, n_ctiles),
        in_specs=[
            # current row tile
            pl.BlockSpec((1, TM, Cin), lambda n, t, c: (n, t, 0)),
            # halo: only halo_pad rows starting right after the current tile
            pl.BlockSpec((1, halo_pad, Cin),
                         lambda n, t, c: (n, (t + 1) * halo_stride, 0)),
            # flattened im2col weights, tiled over cout
            pl.BlockSpec((Kdim, TC), lambda n, t, c: (0, c)),
        ],
        out_specs=(
            pl.BlockSpec((1, TM, TC), lambda n, t, c: (n, t, c)),
            pl.BlockSpec((1, 1, 1, TC), lambda n, t, c: (n, t, 0, c)),
            pl.BlockSpec((1, 1, 1, TC), lambda n, t, c: (n, t, 0, c)),
        ),
        scratch_shapes=[pltpu.VMEM((TM, Kdim), jnp.bfloat16)],      # im2col patch
        compiler_params=pltpu.CompilerParams(
            dimension_semantics=("parallel", "parallel", "arbitrary"),
            vmem_limit_bytes=vmem_limit),
    )(xflat, xflat, w_k)

    # Tiny cross-tile reduction + BN coefficient folding (O(Cpad) work).
    count = N * Ho * Wo
    mean = jnp.sum(ssum, axis=(0, 1, 2)) / count
    msq = jnp.sum(ssq, axis=(0, 1, 2)) / count
    var = jnp.maximum(msq - mean * mean, 0.0)            # biased (training-mode) variance
    scale = gamma.astype(jnp.float32) * lax.rsqrt(var[:Cout] + BN_EPS)
    shift = beta.astype(jnp.float32) - mean[:Cout] * scale

    # BN affine + ReLU fused by XLA into the (required anyway) crop / NCHW
    # transpose: one bf16 read of the conv output, one f32 write of the result.
    y = conv_wide[:, :R, :Cout].astype(jnp.float32) * scale + shift
    if with_nonlinearity:
        y = jnp.maximum(y, 0.0)
    out = y.reshape(N, Ho, Wp, Cout)[:, :, :Wo, :]
    return jnp.transpose(out, (0, 3, 1, 2))


def conv_block_reference(x, w, b, gamma, beta, *, padding=1,
                         with_nonlinearity=True, round_conv_to_bf16=False):
    """Pure-JAX reference matching PyTorch ConvBlock.forward (training-mode BN).
    round_conv_to_bf16 models the kernel's bf16 conv intermediate."""
    y = lax.conv_general_dilated(
        x.astype(jnp.float32), w.astype(jnp.float32), window_strides=(1, 1),
        padding=[(padding, padding), (padding, padding)],
        dimension_numbers=("NCHW", "OIHW", "NCHW"),
        precision=lax.Precision.HIGHEST)
    y = y + b[None, :, None, None]
    y_app = y.astype(jnp.bfloat16).astype(jnp.float32) if round_conv_to_bf16 else y
    mean = jnp.mean(y, axis=(0, 2, 3), keepdims=True)
    var = jnp.mean(jnp.square(y - mean), axis=(0, 2, 3), keepdims=True)
    y = (y_app - mean) * lax.rsqrt(var + BN_EPS)
    y = y * gamma[None, :, None, None] + beta[None, :, None, None]
    if with_nonlinearity:
        y = jnp.maximum(y, 0.0)
    return y


if __name__ == "__main__":
    # Small deterministic shapes consistent with ConvBlock(in=4, out=8).
    N, Cin, H, W = 2, 4, 16, 16
    Cout, KH, KW = 8, 3, 3

    key = jax.random.PRNGKey(0)
    kx_, kw_, kb_, kg_, kbeta_ = jax.random.split(key, 5)
    x = jax.random.normal(kx_, (N, Cin, H, W), dtype=jnp.float32)
    w = 0.1 * jax.random.normal(kw_, (Cout, Cin, KH, KW), dtype=jnp.float32)
    b = 0.1 * jax.random.normal(kb_, (Cout,), dtype=jnp.float32)
    gamma = 1.0 + 0.1 * jax.random.normal(kg_, (Cout,), dtype=jnp.float32)
    beta = 0.1 * jax.random.normal(kbeta_, (Cout,), dtype=jnp.float32)

    # row_block=128 keeps several row tiles at this small size so the
    # multi-tile / halo-block / masking paths are exercised.
    fwd = jax.jit(functools.partial(conv_block_forward, row_block=128))
    out = jax.block_until_ready(fwd(x, w, b, gamma, beta))
    assert out.shape == (N, Cout, H, W), out.shape

    # Reference 1: f32 PyTorch-semantics ConvBlock (conv bias included - it cancels).
    ref32 = conv_block_reference(x, w, b, gamma, beta)
    # Reference 2: same math modelling the kernel's compute path: bf16 conv
    # operands, bias folded out, conv output rounded to bf16 before the BN affine.
    xb = x.astype(jnp.bfloat16).astype(jnp.float32)
    wb = w.astype(jnp.bfloat16).astype(jnp.float32)
    refbf = conv_block_reference(xb, wb, jnp.zeros_like(b), gamma, beta,
                                 round_conv_to_bf16=True)

    err_bf = float(jnp.max(jnp.abs(out - refbf)))
    err_32 = float(jnp.max(jnp.abs(out - ref32)))
    assert jnp.allclose(out, refbf, atol=5e-3, rtol=5e-3), err_bf
    assert jnp.allclose(out, ref32, atol=5e-2, rtol=5e-2), err_32
    print("KERNEL_OK")
</pallas_src>

<mosaic_0001>
module attributes {stable_mosaic.version = 11 : i64} {
  func.func @_conv_stats_kernel(%arg0: i32, %arg1: i32, %arg2: i32, %arg3: memref<1x144x4xbf16, #tpu.memory_space<vmem>>, %arg4: memref<1x48x4xbf16, #tpu.memory_space<vmem>>, %arg5: memref<36x128xbf16, #tpu.memory_space<vmem>>, %arg6: memref<1x144x128xbf16, #tpu.memory_space<vmem>>, %arg7: memref<1x1x1x128xf32, #tpu.memory_space<vmem>>, %arg8: memref<1x1x1x128xf32, #tpu.memory_space<vmem>>, %arg9: memref<144x36xbf16, #tpu.memory_space<vmem>>) attributes {dimension_semantics = [#tpu.dimension_semantics<parallel>, #tpu.dimension_semantics<parallel>, #tpu.dimension_semantics<arbitrary>], iteration_bounds = array<i64: 2, 2, 1>, scalar_prefetch = 0 : i64, scratch_operands = 1 : i64, tpu.core_type = #tpu.core_type<tc>, window_params = [{transform_indices = @transform_0, window_bounds = array<i64: 1, 144, 4>}, {transform_indices = @transform_1, window_bounds = array<i64: 1, 48, 4>}, {transform_indices = @transform_2, window_bounds = array<i64: 36, 128>}, {transform_indices = @transform_3, window_bounds = array<i64: 1, 144, 128>}, {transform_indices = @transform_4, window_bounds = array<i64: 1, 1, 1, 128>}, {transform_indices = @transform_5, window_bounds = array<i64: 1, 1, 1, 128>}]} {
    %c0_i32 = arith.constant 0 : i32
    %0 = arith.cmpi eq, %arg2, %c0_i32 : i32
    %1 = arith.extui %0 : i1 to i32
    %c0_i32_0 = arith.constant 0 : i32
    %2 = arith.cmpi ne, %1, %c0_i32_0 : i32
    scf.if %2 {
      %c0_18 = arith.constant 0 : index
      %c0_19 = arith.constant 0 : index
      %c0_20 = arith.constant 0 : index
      %41 = vector.load %arg3[%c0_18, %c0_19, %c0_20] : memref<1x144x4xbf16, #tpu.memory_space<vmem>>, vector<1x144x4xbf16>
      %42 = vector.shape_cast %41 : vector<1x144x4xbf16> to vector<144x4xbf16>
      %c0_21 = arith.constant 0 : index
      %c0_22 = arith.constant 0 : index
      %c0_23 = arith.constant 0 : index
      %43 = vector.load %arg4[%c0_21, %c0_22, %c0_23] : memref<1x48x4xbf16, #tpu.memory_space<vmem>>, vector<1x48x4xbf16>
      %44 = vector.shape_cast %43 : vector<1x48x4xbf16> to vector<48x4xbf16>
      %45 = tpu.concatenate %42, %44 in 0 : vector<144x4xbf16>, vector<48x4xbf16> -> vector<192x4xbf16>
      %46 = vector.extract_strided_slice %45 {offsets = [0, 0], sizes = [144, 4], strides = [1, 1]} : vector<192x4xbf16> to vector<144x4xbf16>
      %47 = vector.extract_strided_slice %45 {offsets = [1, 0], sizes = [144, 4], strides = [1, 1]} : vector<192x4xbf16> to vector<144x4xbf16>
      %48 = vector.extract_strided_slice %45 {offsets = [2, 0], sizes = [144, 4], strides = [1, 1]} : vector<192x4xbf16> to vector<144x4xbf16>
      %49 = vector.extract_strided_slice %45 {offsets = [18, 0], sizes = [144, 4], strides = [1, 1]} : vector<192x4xbf16> to vector<144x4xbf16>
      %50 = vector.extract_strided_slice %45 {offsets = [19, 0], sizes = [144, 4], strides = [1, 1]} : vector<192x4xbf16> to vector<144x4xbf16>
      %51 = vector.extract_strided_slice %45 {offsets = [20, 0], sizes = [144, 4], strides = [1, 1]} : vector<192x4xbf16> to vector<144x4xbf16>
      %52 = vector.extract_strided_slice %45 {offsets = [36, 0], sizes = [144, 4], strides = [1, 1]} : vector<192x4xbf16> to vector<144x4xbf16>
      %53 = vector.extract_strided_slice %45 {offsets = [37, 0], sizes = [144, 4], strides = [1, 1]} : vector<192x4xbf16> to vector<144x4xbf16>
      %54 = vector.extract_strided_slice %45 {offsets = [38, 0], sizes = [144, 4], strides = [1, 1]} : vector<192x4xbf16> to vector<144x4xbf16>
      %55 = tpu.concatenate %46, %47, %48, %49, %50, %51, %52, %53, %54 in 1 : vector<144x4xbf16>, vector<144x4xbf16>, vector<144x4xbf16>, vector<144x4xbf16>, vector<144x4xbf16>, vector<144x4xbf16>, vector<144x4xbf16>, vector<144x4xbf16>, vector<144x4xbf16> -> vector<144x36xbf16>
      %c0_24 = arith.constant 0 : index
      %c0_25 = arith.constant 0 : index
      %56 = vector.load %arg9[%c0_24, %c0_25] : memref<144x36xbf16, #tpu.memory_space<vmem>>, vector<144x36xbf16>
      tpu.vector_store %arg9[%c0_24, %c0_25], %55 {strides = array<i32>} : memref<144x36xbf16, #tpu.memory_space<vmem>>, vector<144x36xbf16>,
    } else {
    }
    %c0 = arith.constant 0 : index
    %c0_1 = arith.constant 0 : index
    %3 = vector.load %arg9[%c0, %c0_1] : memref<144x36xbf16, #tpu.memory_space<vmem>>, vector<144x36xbf16>
    %c0_2 = arith.constant 0 : index
    %c0_3 = arith.constant 0 : index
    %4 = vector.load %arg5[%c0_2, %c0_3] : memref<36x128xbf16, #tpu.memory_space<vmem>>, vector<36x128xbf16>
    %cst = arith.constant dense<0.000000e+00> : vector<144x128xf32>
    %5 = tpu.matmul %3, %4, %cst {dimension_numbers = #tpu.dot_dimension_numbers<[1], [0], [0], [1], [0, 0, 1, 1], [], []>} : vector<144x36xbf16>, vector<36x128xbf16>, vector<144x128xf32> -> vector<144x128xf32>
    %6 = arith.truncf %5 : vector<144x128xf32> to vector<144x128xbf16>
    %c0_4 = arith.constant 0 : index
    %c0_5 = arith.constant 0 : index
    %c0_6 = arith.constant 0 : index
    %7 = vector.load %arg6[%c0_4, %c0_5, %c0_6] : memref<1x144x128xbf16, #tpu.memory_space<vmem>>, vector<1x144x128xbf16>
    %8 = vector.shape_cast %7 : vector<1x144x128xbf16> to vector<144x128xbf16>
    %9 = vector.shape_cast %6 : vector<144x128xbf16> to vector<1x144x128xbf16>
    tpu.vector_store %arg6[%c0_4, %c0_5, %c0_6], %9 {strides = array<i32>} : memref<1x144x128xbf16, #tpu.memory_space<vmem>>, vector<1x144x128xbf16>,
    %c144_i32 = arith.constant 144 : i32
    %10 = arith.muli %arg1, %c144_i32 : i32
    %11 = tpu.iota {dimensions = array<i32: 0>} : vector<144x1xi32>
    %12 = vector.broadcast %10 : i32 to vector<144x1xi32>
    %13 = arith.addi %12, %11 : vector<144x1xi32>
    %14 = arith.sitofp %13 : vector<144x1xi32> to vector<144x1xf32>
    %cst_7 = arith.constant 1.800000e+01 : f32
    %15 = vector.broadcast %cst_7 : f32 to vector<144x1xf32>
    %16 = arith.divf %14, %15 : vector<144x1xf32>
    %17 = arith.fptosi %16 : vector<144x1xf32> to vector<144x1xi32>
    %c18_i32 = arith.constant 18 : i32
    %18 = vector.broadcast %c18_i32 : i32 to vector<144x1xi32>
    %19 = arith.muli %17, %18 : vector<144x1xi32>
    %20 = arith.subi %13, %19 : vector<144x1xi32>
    %c16_i32 = arith.constant 16 : i32
    %21 = vector.broadcast %c16_i32 : i32 to vector<144x1xi32>
    %22 = arith.cmpi slt, %20, %21 : vector<144x1xi32>
    %c288_i32 = arith.constant 288 : i32
    %23 = vector.broadcast %c288_i32 : i32 to vector<144x1xi32>
    %24 = arith.cmpi slt, %13, %23 : vector<144x1xi32>
    %25 = arith.andi %22, %24 : vector<144x1xi1>
    %26 = arith.extui %25 : vector<144x1xi1> to vector<144x1xi32>
    %27 = arith.sitofp %26 : vector<144x1xi32> to vector<144x1xf32>
    %28 = vector.broadcast %27 : vector<144x1xf32> to vector<144x128xf32>
    %29 = arith.mulf %5, %28 : vector<144x128xf32>
    %cst_8 = arith.constant dense<0.000000e+00> : vector<128xf32>
    %30 = vector.multi_reduction <add>, %29, %cst_8 [0] : vector<144x128xf32> to vector<128xf32>
    %31 = vector.shape_cast %30 : vector<128xf32> to vector<1x128xf32>
    %c0_9 = arith.constant 0 : index
    %c0_10 = arith.constant 0 : index
    %c0_11 = arith.constant 0 : index
    %c0_12 = arith.constant 0 : index
    %32 = vector.load %arg7[%c0_9, %c0_10, %c0_11, %c0_12] : memref<1x1x1x128xf32, #tpu.memory_space<vmem>>, vector<1x1x1x128xf32>
    %33 = vector.shape_cast %32 : vector<1x1x1x128xf32> to vector<1x128xf32>
    %34 = vector.shape_cast %31 : vector<1x128xf32> to vector<1x1x1x128xf32>
    tpu.vector_store %arg7[%c0_9, %c0_10, %c0_11, %c0_12], %34 {strides = array<i32>} : memref<1x1x1x128xf32, #tpu.memory_space<vmem>>, vector<1x1x1x128xf32>,
    %35 = arith.mulf %29, %29 : vector<144x128xf32>
    %cst_13 = arith.constant dense<0.000000e+00> : vector<128xf32>
    %36 = vector.multi_reduction <add>, %35, %cst_13 [0] : vector<144x128xf32> to vector<128xf32>
    %37 = vector.shape_cast %36 : vector<128xf32> to vector<1x128xf32>
    %c0_14 = arith.constant 0 : index
    %c0_15 = arith.constant 0 : index
    %c0_16 = arith.constant 0 : index
    %c0_17 = arith.constant 0 : index
    %38 = vector.load %arg8[%c0_14, %c0_15, %c0_16, %c0_17] : memref<1x1x1x128xf32, #tpu.memory_space<vmem>>, vector<1x1x1x128xf32>
    %39 = vector.shape_cast %38 : vector<1x1x1x128xf32> to vector<1x128xf32>
    %40 = vector.shape_cast %37 : vector<1x128xf32> to vector<1x1x1x128xf32>
    tpu.vector_store %arg8[%c0_14, %c0_15, %c0_16, %c0_17], %40 {strides = array<i32>} : memref<1x1x1x128xf32, #tpu.memory_space<vmem>>, vector<1x1x1x128xf32>,
    return
  }
  func.func @transform_0(%arg0: i32, %arg1: i32, %arg2: i32) -> (i32, i32, i32) {
    %c0_i32 = arith.constant 0 : i32
    %c0_i32_0 = arith.constant 0 : i32
    return %arg0, %arg1, %c0_i32 : i32, i32, i32
  }
  func.func @transform_1(%arg0: i32, %arg1: i32, %arg2: i32) -> (i32, i32, i32) {
    %c1_i32 = arith.constant 1 : i32
    %0 = arith.addi %arg1, %c1_i32 : i32
    %c3_i32 = arith.constant 3 : i32
    %1 = arith.muli %0, %c3_i32 : i32
    %c0_i32 = arith.constant 0 : i32
    %c0_i32_0 = arith.constant 0 : i32
    return %arg0, %1, %c0_i32 : i32, i32, i32
  }
  func.func @transform_2(%arg0: i32, %arg1: i32, %arg2: i32) -> (i32, i32) {
    %c0_i32 = arith.constant 0 : i32
    %c0_i32_0 = arith.constant 0 : i32
    return %c0_i32, %arg2 : i32, i32
  }
  func.func @transform_3(%arg0: i32, %arg1: i32, %arg2: i32) -> (i32, i32, i32) {
    %c0_i32 = arith.constant 0 : i32
    return %arg0, %arg1, %arg2 : i32, i32, i32
  }
  func.func @transform_4(%arg0: i32, %arg1: i32, %arg2: i32) -> (i32, i32, i32, i32) {
    %c0_i32 = arith.constant 0 : i32
    %c0_i32_0 = arith.constant 0 : i32
    return %arg0, %arg1, %c0_i32, %arg2 : i32, i32, i32, i32
  }
  func.func @transform_5(%arg0: i32, %arg1: i32, %arg2: i32) -> (i32, i32, i32, i32) {
    %c0_i32 = arith.constant 0 : i32
    %c0_i32_0 = arith.constant 0 : i32
    return %arg0, %arg1, %c0_i32, %arg2 : i32, i32, i32, i32
  }
}

</mosaic_0001>

<llo_original>
// kernel: conv_block_forward.1
$region0: #{conv_block_forward.1}
  #allocation0 [shape = 'u32[]', space=smem, size = 0x4, offset = 0x4, fixed_abs, tag = 'smem constant byte address 0x4 - core index']
  #allocation1 [shape = 'u32[144,128]{1,0:T(1,128)}', space=vmem, size = 0x12000, scoped, tag = 'internal scratch']
  #allocation2 [shape = 'bf16[144,36]{1,0:T(8,128)(2,1)}', space=vmem, size = 0x9000, scoped, tag = 'scratch operand']
  %s0 = inlined_call_operand.vmem [shape: bf16[2,336,4], index: 0, kind: input, shape index: {}, may-alias: {0,1}]
  %s1 = inlined_call_operand.vmem [shape: bf16[2,336,4], index: 1, kind: input, shape index: {}, may-alias: {0,1}]
  %s2 = inlined_call_operand.vmem [shape: bf16[36,128], index: 2, kind: input, shape index: {}]
  %s3 = inlined_call_operand.vmem [shape: bf16[2,288,128], index: 3, kind: output, shape index: {0}]
  %s4 = inlined_call_operand.vmem [shape: f32[2,2,1,128], index: 4, kind: output, shape index: {1}]
  %s5 = inlined_call_operand.vmem [shape: f32[2,2,1,128], index: 5, kind: output, shape index: {2}]
  %6 = xla_tuple %s3, %s4, %s5
  %s7 = sld [smem:[#allocation0]]
  $region65: #{conv_block_forward.1} parent=0
    _
  %s9 = ssub.s32 1, %s7
  %s10 = scalar_select 0, %s9, %s7
  loop: start=0, step=1, limit=6
  $region2: #{conv_block_forward.1} parent=0 // loop_pre_header
    _
  $region3: #{conv_block_forward.1} parent=0 // loop_header
    %s12 = sphi 0, %s16
    %p13 = scmp.ge.s32.totalorder %s12, 6
    %s19 = sphi 0, %s38
    %s20 = sphi 0, %s34
    %s21 = sphi 0, %s30
    %s22 = sphi 0, %s19
    %s23 = sphi 0, %s20
    %s24 = sphi 0, %s21
    %s25 = sphi 0, %s22
    %s26 = sphi 0, %s23
    %s27 = sphi 0, %s24
    %s43 = sphi 0, %s45
    %s46 = sphi 0, %s43
    %s47 = sphi 0, %s46
    %s63 = sphi 0, %s47
    %s75 = sphi 0, %s77
    %s78 = sphi 0, %s75
    %s79 = sphi 0, %s78
    %s95 = sphi 0, %s79
    %s101 = sphi 0, %s103
    %s104 = sphi 0, %s101
    %s105 = sphi 0, %s104
    %s121 = sphi 0, %s105
    %s131 = sphi 0, %s133
    %s134 = sphi 0, %s131
    %s135 = sphi 0, %s134
    %s151 = sphi 0, %s135
    %s161 = sphi 0, %s163
    %s164 = sphi 0, %s161
    %s165 = sphi 0, %s164
    %s181 = sphi 0, %s165
    %s191 = sphi 0, %s193
    %s194 = sphi 0, %s191
    %s195 = sphi 0, %s194
    %s211 = sphi 0, %s195
  $region4: #{conv_block_forward.1} parent=0 // loop_header_branch
    %15 = sbr.rel (%p13) target = $region8
  $region5: #{conv_block_forward.1} parent=0 // loop_body
    %s17 = ssub.s32 %s12, 1
    %s18 = ssub.s32 %s12, 2
    %s28 = sadd.s32 1, %s21
    %p29 = scmp.ge.s32.totalorder %s28, 1
    %s30 = scalar_select %p29, 0, %s28
    %s31 = sadd.s32 1, %s20
    %s32 = scalar_select %p29, %s31, %s20
    %p33 = scmp.ge.s32.totalorder %s32, 2
    %s34 = scalar_select %p33, 0, %s32
    %s35 = sadd.s32 1, %s19
    %s36 = scalar_select %p33, %s35, %s19
    %p37 = scmp.ge.s32.totalorder %s36, 2
    %s38 = scalar_select %p37, 0, %s36
    %s39 = ssub.s32 %s19, %s38
    %s40 = ssub.s32 %s20, %s34
    %s41 = sor.u32 %s39, %s40
    %p42 = scmp.eq.s32.totalorder %s41, 0
    %s44 = sadd.s32 %s43, 1
    %s45 = scalar_select %p42, %s43, %s44
    %p48 = pneg %p42
    %p49 = scmp.eq.s32.totalorder %s12, 3
    %p50 = por %p48, %p49
    %p51 = scmp.ne.s32.totalorder %s43, %s46
    %p52 = scmp.eq.s32.totalorder %s12, 0
    %p53 = por %p51, %p52
    %p54 = scmp.ne.s32.totalorder %s43, %s46
    %p55 = scmp.eq.s32.totalorder %s17, 3
    %p56 = por %p54, %p55
    %p57 = scmp.ne.s32.totalorder %s46, %s47
    %p58 = scmp.eq.s32.totalorder %s17, 0
    %p59 = por %p57, %p58
    %p60 = scmp.ne.s32.totalorder %s46, %s47
    %p61 = scmp.eq.s32.totalorder %s18, 3
    %p62 = por %p60, %p61
    %p64 = scmp.ne.s32.totalorder %s47, %s63
    %p65 = scmp.eq.s32.totalorder %s18, 0
    %p66 = por %p64, %p65
    %s67 = sadd.s32 %s20, 1
    %s68 = smul.u32 %s67, 3
    %s69 = sadd.s32 %s34, 1
    %s70 = smul.u32 %s69, 3
    %s71 = ssub.s32 %s19, %s38
    %s72 = ssub.s32 %s68, %s70
    %s73 = sor.u32 %s71, %s72
    %p74 = scmp.eq.s32.totalorder %s73, 0
    %s76 = sadd.s32 %s75, 1
    %s77 = scalar_select %p74, %s75, %s76
    %p80 = pneg %p74
    %p81 = scmp.eq.s32.totalorder %s12, 3
    %p82 = por %p80, %p81
    %p83 = scmp.ne.s32.totalorder %s75, %s78
    %p84 = scmp.eq.s32.totalorder %s12, 0
    %p85 = por %p83, %p84
    %p86 = scmp.ne.s32.totalorder %s75, %s78
    %p87 = scmp.eq.s32.totalorder %s17, 3
    %p88 = por %p86, %p87
    %p89 = scmp.ne.s32.totalorder %s78, %s79
    %p90 = scmp.eq.s32.totalorder %s17, 0
    %p91 = por %p89, %p90
    %p92 = scmp.ne.s32.totalorder %s78, %s79
    %p93 = scmp.eq.s32.totalorder %s18, 3
    %p94 = por %p92, %p93
    %p96 = scmp.ne.s32.totalorder %s79, %s95
    %p97 = scmp.eq.s32.totalorder %s18, 0
    %p98 = por %p96, %p97
    %s99 = ssub.s32 %s21, %s30
    %p100 = scmp.eq.s32.totalorder %s99, 0
    %s102 = sadd.s32 %s101, 1
    %s103 = scalar_select %p100, %s101, %s102
    %p106 = pneg %p100
    %p107 = scmp.eq.s32.totalorder %s12, 3
    %p108 = por %p106, %p107
    %p109 = scmp.ne.s32.totalorder %s101, %s104
    %p110 = scmp.eq.s32.totalorder %s12, 0
    %p111 = por %p109, %p110
    %p112 = scmp.ne.s32.totalorder %s101, %s104
    %p113 = scmp.eq.s32.totalorder %s17, 3
    %p114 = por %p112, %p113
    %p115 = scmp.ne.s32.totalorder %s104, %s105
    %p116 = scmp.eq.s32.totalorder %s17, 0
    %p117 = por %p115, %p116
    %p118 = scmp.ne.s32.totalorder %s104, %s105
    %p119 = scmp.eq.s32.totalorder %s18, 3
    %p120 = por %p118, %p119
    %p122 = scmp.ne.s32.totalorder %s105, %s121
    %p123 = scmp.eq.s32.totalorder %s18, 0
    %p124 = por %p122, %p123
    %s125 = ssub.s32 %s19, %s38
    %s126 = ssub.s32 %s20, %s34
    %s127 = sor.u32 %s125, %s126
    %s128 = ssub.s32 %s21, %s30
    %s129 = sor.u32 %s127, %s128
    %p130 = scmp.eq.s32.totalorder %s129, 0
    %s132 = sadd.s32 %s131, 1
    %s133 = scalar_select %p130, %s131, %s132
    %p136 = pneg %p130
    %p137 = scmp.eq.s32.totalorder %s12, 3
    %p138 = por %p136, %p137
    %p139 = scmp.ne.s32.totalorder %s131, %s134
    %p140 = scmp.eq.s32.totalorder %s12, 0
    %p141 = por %p139, %p140
    %p142 = scmp.ne.s32.totalorder %s131, %s134
    %p143 = scmp.eq.s32.totalorder %s17, 3
    %p144 = por %p142, %p143
    %p145 = scmp.ne.s32.totalorder %s134, %s135
    %p146 = scmp.eq.s32.totalorder %s17, 0
    %p147 = por %p145, %p146
    %p148 = scmp.ne.s32.totalorder %s134, %s135
    %p149 = scmp.eq.s32.totalorder %s18, 3
    %p150 = por %p148, %p149
    %p152 = scmp.ne.s32.totalorder %s135, %s151
    %p153 = scmp.eq.s32.totalorder %s18, 0
    %p154 = por %p152, %p153
    %s155 = ssub.s32 %s19, %s38
    %s156 = ssub.s32 %s20, %s34
    %s157 = sor.u32 %s155, %s156
    %s158 = ssub.s32 %s21, %s30
    %s159 = sor.u32 %s157, %s158
    %p160 = scmp.eq.s32.totalorder %s159, 0
    %s162 = sadd.s32 %s161, 1
    %s163 = scalar_select %p160, %s161, %s162
    %p166 = pneg %p160
    %p167 = scmp.eq.s32.totalorder %s12, 3
    %p168 = por %p166, %p167
    %p169 = scmp.ne.s32.totalorder %s161, %s164
    %p170 = scmp.eq.s32.totalorder %s12, 0
    %p171 = por %p169, %p170
    %p172 = scmp.ne.s32.totalorder %s161, %s164
    %p173 = scmp.eq.s32.totalorder %s17, 3
    %p174 = por %p172, %p173
    %p175 = scmp.ne.s32.totalorder %s164, %s165
    %p176 = scmp.eq.s32.totalorder %s17, 0
    %p177 = por %p175, %p176
    %p178 = scmp.ne.s32.totalorder %s164, %s165
    %p179 = scmp.eq.s32.totalorder %s18, 3
    %p180 = por %p178, %p179
    %p182 = scmp.ne.s32.totalorder %s165, %s181
    %p183 = scmp.eq.s32.totalorder %s18, 0
    %p184 = por %p182, %p183
    %s185 = ssub.s32 %s19, %s38
    %s186 = ssub.s32 %s20, %s34
    %s187 = sor.u32 %s185, %s186
    %s188 = ssub.s32 %s21, %s30
    %s189 = sor.u32 %s187, %s188
    %p190 = scmp.eq.s32.totalorder %s189, 0
    %s192 = sadd.s32 %s191, 1
    %s193 = scalar_select %p190, %s191, %s192
    %p196 = pneg %p190
    %p197 = scmp.eq.s32.totalorder %s12, 3
    %p198 = por %p196, %p197
    %p199 = scmp.ne.s32.totalorder %s191, %s194
    %p200 = scmp.eq.s32.totalorder %s12, 0
    %p201 = por %p199, %p200
    %p202 = scmp.ne.s32.totalorder %s191, %s194
    %p203 = scmp.eq.s32.totalorder %s17, 3
    %p204 = por %p202, %p203
    %p205 = scmp.ne.s32.totalorder %s194, %s195
    %p206 = scmp.eq.s32.totalorder %s17, 0
    %p207 = por %p205, %p206
    %p208 = scmp.ne.s32.totalorder %s194, %s195
    %p209 = scmp.eq.s32.totalorder %s18, 3
    %p210 = por %p208, %p209
    %p212 = scmp.ne.s32.totalorder %s195, %s211
    %p213 = scmp.eq.s32.totalorder %s18, 0
    %p214 = por %p212, %p213
    %p215 = scmp.le.s32.totalorder 1, %s12
    %p216 = scmp.lt.s32.totalorder %s12, 5
    %p217 = pnand %p215, %p216
    %p218 = pneg %p217
    // Predicated region
    $region9: #{conv_block_forward.1} parent=5 // pred_check
      _
    $region10: #{conv_block_forward.1} parent=5 // pred_check_branch
      %220 = sbr.rel (%p217) target = $region12
    $region11: #{conv_block_forward.1} parent=5 // pred_region
      %s221 = ssub.s32 %s12, 1
      // Predicated region
      $region13: #{conv_block_forward.1} parent=11 // pred_check
        %p222 = pneg %p117
      $region14: #{conv_block_forward.1} parent=11 // pred_check_branch
        %224 = sbr.rel (%p222) target = $region16
      $region15: #{conv_block_forward.1} parent=11 // pred_region
        %p225 = scmp.lt.s32.totalorder %s24, 0
        %s226 = scalar_select %p225, %s24, 0
        %s227 = smul.addr %s226, 4
        %s228 = scalar_lea.vmem %s2, %s227
      $region16: #{conv_block_forward.1} parent=11 // pred_fallthru
        _
    $region12: #{conv_block_forward.1} parent=5 // pred_fallthru
      _
    %p229 = scmp.lt.s32.totalorder %s12, 4
    // Predicated region
    $region17: #{conv_block_forward.1} parent=5 // pred_check
      %p230 = pneg %p229
    $region18: #{conv_block_forward.1} parent=5 // pred_check_branch
      %232 = sbr.rel (%p230) target = $region20
    $region19: #{conv_block_forward.1} parent=5 // pred_region
      // Predicated region
      $region21: #{conv_block_forward.1} parent=19 // pred_check
        %p233 = pneg %p53
      $region22: #{conv_block_forward.1} parent=19 // pred_check_branch
        %235 = sbr.rel (%p233) target = $region24
      $region23: #{conv_block_forward.1} parent=19 // pred_region
        %s236 = smul.u32 18, %s20
        %s237 = ssub.s32 42, %s236
        %p238 = scmp.lt.s32.totalorder %s237, 18
        %s239 = scalar_select %p238, %s237, 18
        %s240 = smul.u32 64, %s239
        %p241 = scmp.lt.s32.totalorder %s19, 1
        %s242 = scalar_select %p241, %s19, 1
        %p243 = scmp.lt.s32.totalorder %s236, 41
        %s244 = scalar_select %p243, %s236, 41
        %s245 = smul.addr %s242, 42
        %s246 = sadd.s32 %s244, %s245
        %s247 = smul.addr %s246, 4
        %s248 = scalar_lea.vmem %s0, %s247
        %s249 = smul.u32 18, %s20
        %s250 = ssub.s32 42, %s249
        %p251 = scmp.lt.s32.totalorder %s250, 18
        %s252 = scalar_select %p251, %s250, 18
        %s253 = smul.u32 64, %s252
      $region24: #{conv_block_forward.1} parent=19 // pred_fallthru
        _
      // Predicated region
      $region25: #{conv_block_forward.1} parent=19 // pred_check
        %p254 = pneg %p85
      $region26: #{conv_block_forward.1} parent=19 // pred_check_branch
        %256 = sbr.rel (%p254) target = $region28
      $region27: #{conv_block_forward.1} parent=19 // pred_region
        %s257 = sadd.s32 %s20, 1
        %s258 = smul.u32 %s257, 3
        %s259 = smul.u32 6, %s258
        %p260 = scmp.lt.s32.totalorder %s19, 1
        %s261 = scalar_select %p260, %s19, 1
        %p262 = scmp.lt.s32.totalorder %s259, 41
        %s263 = scalar_select %p262, %s259, 41
        %s264 = smul.addr %s261, 42
        %s265 = sadd.s32 %s263, %s264
        %s266 = smul.addr %s265, 4
        %s267 = scalar_lea.vmem %s1, %s266
        %s268 = sadd.s32 %s20, 1
        %s269 = smul.u32 %s268, 3
        %s270 = smul.u32 6, %s269
      $region28: #{conv_block_forward.1} parent=19 // pred_fallthru
        _
    $region20: #{conv_block_forward.1} parent=5 // pred_fallthru
      _
    %p271 = scmp.le.s32.totalorder 1, %s12
    %p272 = scmp.lt.s32.totalorder %s12, 5
    %p273 = pnand %p271, %p272
    %p274 = pneg %p273
    // Predicated region
    $region29: #{conv_block_forward.1} parent=5 // pred_check
      _
    $region30: #{conv_block_forward.1} parent=5 // pred_check_branch
      %276 = sbr.rel (%p273) target = $region32
    $region31: #{conv_block_forward.1} parent=5 // pred_region
      %s277 = ssub.s32 %s12, 1
      %s278 = smul.u32 18, %s23
      %s279 = ssub.s32 42, %s278
      %p280 = scmp.lt.s32.totalorder %s279, 18
      %s281 = scalar_select %p280, %s279, 18
      %s282 = smul.u32 64, %s281
      %p283 = scmp.lt.s32.totalorder %s22, 1
      %s284 = scalar_select %p283, %s22, 1
      %p285 = scmp.lt.s32.totalorder %s278, 41
      %s286 = scalar_select %p285, %s278, 41
      %s287 = smul.addr %s284, 42
      %s288 = sadd.s32 %s286, %s287
      %s289 = smul.addr %s288, 4
      %s290 = scalar_lea.vmem %s0, %s289
      %p291 = pneg %p59
      %p292 = pneg %p56
      %s293 = sadd.s32 %s23, 1
      %s294 = smul.u32 %s293, 3
      %s295 = smul.u32 6, %s294
      %p296 = scmp.lt.s32.totalorder %s22, 1
      %s297 = scalar_select %p296, %s22, 1
      %p298 = scmp.lt.s32.totalorder %s295, 41
      %s299 = scalar_select %p298, %s295, 41
      %s300 = smul.addr %s297, 42
      %s301 = sadd.s32 %s299, %s300
      %s302 = smul.addr %s301, 4
      %s303 = scalar_lea.vmem %s1, %s302
      %p304 = pneg %p91
      %p305 = pneg %p88
      %p306 = scmp.lt.s32.totalorder %s24, 0
      %s307 = scalar_select %p306, %s24, 0
      %s308 = smul.addr %s307, 4
      %s309 = scalar_lea.vmem %s2, %s308
      %p310 = pneg %p117
      %p311 = pneg %p114
      %p312 = pneg %p147
      %p313 = pneg %p144
      %s314 = smul.u32 18, %s23
      %p315 = scmp.lt.s32.totalorder %s22, 1
      %s316 = scalar_select %p315, %s22, 1
      %p317 = scmp.lt.s32.totalorder %s314, 35
      %s318 = scalar_select %p317, %s314, 35
      %p319 = scmp.lt.s32.totalorder %s24, 0
      %s320 = scalar_select %p319, %s24, 0
      %s321 = sadd.s32 %s320, %s318
      %s322 = smul.addr %s316, 36
      %s323 = sadd.s32 %s321, %s322
      %s324 = smul.addr %s323, 4
      %s325 = scalar_lea.vmem %s3, %s324
      %p326 = pneg %p177
      %p327 = pneg %p174
      %p328 = scmp.lt.s32.totalorder %s22, 1
      %s329 = scalar_select %p328, %s22, 1
      %p330 = scmp.lt.s32.totalorder %s23, 1
      %s331 = scalar_select %p330, %s23, 1
      %p332 = scmp.lt.s32.totalorder %s24, 0
      %s333 = scalar_select %p332, %s24, 0
      %s334 = sadd.s32 %s333, %s331
      %s335 = smul.addr %s329, 2
      %s336 = sadd.s32 %s334, %s335
      %s337 = scalar_lea.vmem %s4, %s336
      %p338 = pneg %p207
      %p339 = pneg %p204
      %p340 = scmp.lt.s32.totalorder %s22, 1
      %s341 = scalar_select %p340, %s22, 1
      %p342 = scmp.lt.s32.totalorder %s23, 1
      %s343 = scalar_select %p342, %s23, 1
      %p344 = scmp.lt.s32.totalorder %s24, 0
      %s345 = scalar_select %p344, %s24, 0
      %s346 = sadd.s32 %s345, %s343
      %s347 = smul.addr %s341, 2
      %s348 = sadd.s32 %s346, %s347
      %s349 = scalar_lea.vmem %s5, %s348
      %s350 = smul.u32 18, %s23
      %s351 = ssub.s32 42, %s350
      %p352 = scmp.lt.s32.totalorder %s351, 18
      %s353 = scalar_select %p352, %s351, 18
      %s354 = smul.u32 64, %s353
      %p355 = scmp.lt.s32.totalorder %s22, 1
      %s356 = scalar_select %p355, %s22, 1
      %p357 = scmp.lt.s32.totalorder %s350, 41
      %s358 = scalar_select %p357, %s350, 41
      %s359 = smul.addr %s356, 42
      %s360 = sadd.s32 %s358, %s359
      %s361 = smul.addr %s360, 4
      %s362 = scalar_lea.vmem %s0, %s361
      %s363 = smul.u32 18, %s23
      %s364 = ssub.s32 42, %s363
      %p365 = scmp.lt.s32.totalorder %s364, 18
      %s366 = scalar_select %p365, %s364, 18
      %s367 = smul.u32 64, %s366
      %s368 = sadd.s32 %s23, 1
      %s369 = smul.u32 %s368, 3
      %s370 = smul.u32 6, %s369
      %p371 = scmp.lt.s32.totalorder %s22, 1
      %s372 = scalar_select %p371, %s22, 1
      %p373 = scmp.lt.s32.totalorder %s370, 41
      %s374 = scalar_select %p373, %s370, 41
      %s375 = smul.addr %s372, 42
      %s376 = sadd.s32 %s374, %s375
      %s377 = smul.addr %s376, 4
      %s378 = scalar_lea.vmem %s1, %s377
      %s379 = sadd.s32 %s23, 1
      %s380 = smul.u32 %s379, 3
      %s381 = smul.u32 6, %s380
      %p382 = scmp.lt.s32.totalorder %s24, 0
      %s383 = scalar_select %p382, %s24, 0
      %s384 = smul.addr %s383, 4
      %s385 = scalar_lea.vmem %s2, %s384
      %s386 = smul.u32 18, %s23
      %p387 = scmp.lt.s32.totalorder %s22, 1
      %s388 = scalar_select %p387, %s22, 1
      %p389 = scmp.lt.s32.totalorder %s386, 35
      %s390 = scalar_select %p389, %s386, 35
      %p391 = scmp.lt.s32.totalorder %s24, 0
      %s392 = scalar_select %p391, %s24, 0
      %s393 = sadd.s32 %s392, %s390
      %s394 = smul.addr %s388, 36
      %s395 = sadd.s32 %s393, %s394
      %s396 = smul.addr %s395, 4
      %s397 = scalar_lea.vmem %s3, %s396
      %s398 = smul.u32 18, %s23
      %p399 = scmp.lt.s32.totalorder %s22, 1
      %s400 = scalar_select %p399, %s22, 1
      %p401 = scmp.lt.s32.totalorder %s23, 1
      %s402 = scalar_select %p401, %s23, 1
      %p403 = scmp.lt.s32.totalorder %s24, 0
      %s404 = scalar_select %p403, %s24, 0
      %s405 = sadd.s32 %s404, %s402
      %s406 = smul.addr %s400, 2
      %s407 = sadd.s32 %s405, %s406
      %s408 = scalar_lea.vmem %s4, %s407
      %p409 = scmp.lt.s32.totalorder %s22, 1
      %s410 = scalar_select %p409, %s22, 1
      %p411 = scmp.lt.s32.totalorder %s23, 1
      %s412 = scalar_select %p411, %s23, 1
      %p413 = scmp.lt.s32.totalorder %s24, 0
      %s414 = scalar_select %p413, %s24, 0
      %s415 = sadd.s32 %s414, %s412
      %s416 = smul.addr %s410, 2
      %s417 = sadd.s32 %s415, %s416
      %s418 = scalar_lea.vmem %s5, %s417
      %p420 = scmp.eq.s32.totalorder %s24, 0
      // Predicated region
      $region33: #{conv_block_forward.1} parent=31 // pred_check
        %p421 = pneg %p420
      $region34: #{conv_block_forward.1} parent=31 // pred_check_branch
        %423 = sbr.rel (%p421) target = $region36
      $region35: #{conv_block_forward.1} parent=31 // pred_region
        %v424 = vld [vmem:[%s362] sm:$0xf]
        %v425 = vld [vmem:[%s362 + $0x4] sm:$0xf]
        %v426 = vld [vmem:[%s362 + $0x8] sm:$0xf]
        %v427 = vld [vmem:[%s362 + $0xc] sm:$0xf]
        %v428 = vld [vmem:[%s362 + $0x10] sm:$0xf]
        %v429 = vld [vmem:[%s362 + $0x14] sm:$0xf]
        %v430 = vld [vmem:[%s362 + $0x18] sm:$0xf]
        %v431 = vld [vmem:[%s362 + $0x1c] sm:$0xf]
        %v432 = vld [vmem:[%s362 + $0x20] sm:$0xf]
        %v433 = vld [vmem:[%s362 + $0x24] sm:$0xf]
        %v434 = vld [vmem:[%s362 + $0x28] sm:$0xf]
        %v435 = vld [vmem:[%s362 + $0x2c] sm:$0xf]
        %v436 = vld [vmem:[%s362 + $0x30] sm:$0xf]
        %v437 = vld [vmem:[%s362 + $0x34] sm:$0xf]
        %v438 = vld [vmem:[%s362 + $0x38] sm:$0xf]
        %v439 = vld [vmem:[%s362 + $0x3c] sm:$0xf]
        %v440 = vld [vmem:[%s362 + $0x40] sm:$0xf]
        %v441 = vld [vmem:[%s362 + $0x44] sm:$0xf]
        %v442 = vld [vmem:[%s378] sm:$0xf]
        %v443 = vld [vmem:[%s378 + $0x4] sm:$0xf]
        %v444 = vld [vmem:[%s378 + $0x8] sm:$0xf]
        %v445 = vld [vmem:[%s378 + $0xc] sm:$0xf]
        %v446 = vld [vmem:[%s378 + $0x10] sm:$0xf]
        %v447 = vld [vmem:[%s378 + $0x14] sm:$0xf]
        %v466 = vunpack.c.l.b16 %v424
        %v467 = vunpack.c.l.b16 %v425
        %v468 = vunpack.c.l.b16 %v426
        %v469 = vunpack.c.l.b16 %v427
        %v470 = vunpack.c.l.b16 %v428
        %v471 = vunpack.c.l.b16 %v429
        %v472 = vunpack.c.l.b16 %v430
        %v473 = vunpack.c.l.b16 %v431
        %v474 = vunpack.c.l.b16 %v432
        %v475 = vunpack.c.l.b16 %v433
        %v476 = vunpack.c.l.b16 %v434
        %v477 = vunpack.c.l.b16 %v435
        %v478 = vunpack.c.l.b16 %v436
        %v479 = vunpack.c.l.b16 %v437
        %v480 = vunpack.c.l.b16 %v438
        %v481 = vunpack.c.l.b16 %v439
        %v482 = vunpack.c.l.b16 %v440
        %v483 = vunpack.c.l.b16 %v441
        %v484 = vpack.c.b16 %v467, %v466
        %v485 = vpack.c.b16 %v469, %v468
        %v486 = vpack.c.b16 %v471, %v470
        %v487 = vpack.c.b16 %v473, %v472
        %v488 = vpack.c.b16 %v475, %v474
        %v489 = vpack.c.b16 %v477, %v476
        %v490 = vpack.c.b16 %v479, %v478
        %v491 = vpack.c.b16 %v481, %v480
        %v492 = vpack.c.b16 %v483, %v482
        %v499 = vunpack.c.l.b16 %v442
        %v500 = vunpack.c.l.b16 %v443
        %v501 = vunpack.c.l.b16 %v444
        %v502 = vunpack.c.l.b16 %v445
        %v503 = vunpack.c.l.b16 %v446
        %v504 = vunpack.c.l.b16 %v447
        %v505 = vpack.c.b16 %v500, %v499
        %v506 = vpack.c.b16 %v502, %v501
        %v507 = vpack.c.b16 %v504, %v503
        %vm508 = vsmask.f32 7424
        %v510 = vshrl.u32 %v484, 16
        %v512 = vshll.u32 %v484, 16
        %v514 = vrot.slane %v512, 1
        %v515 = vor.u32 %v510, %v514
        %v517 = vshll.u32 %v485, 16
        %v519 = vrot.slane %v517, 1
        %v520 = vsel %vm508, %v515, %v519
        %v521 = vshrl.u32 %v485, 16
        %v523 = vor.u32 %v521, %v519
        %v525 = vshll.u32 %v486, 16
        %v527 = vrot.slane %v525, 1
        %v528 = vsel %vm508, %v523, %v527
        %v529 = vshrl.u32 %v486, 16
        %v531 = vor.u32 %v529, %v527
        %v533 = vshll.u32 %v487, 16
        %v535 = vrot.slane %v533, 1
        %v536 = vsel %vm508, %v531, %v535
        %v537 = vshrl.u32 %v487, 16
        %v539 = vor.u32 %v537, %v535
        %v541 = vshll.u32 %v488, 16
        %v543 = vrot.slane %v541, 1
        %v544 = vsel %vm508, %v539, %v543
        %v545 = vshrl.u32 %v488, 16
        %v547 = vor.u32 %v545, %v543
        %v549 = vshll.u32 %v489, 16
        %v551 = vrot.slane %v549, 1
        %v552 = vsel %vm508, %v547, %v551
        %v553 = vshrl.u32 %v489, 16
        %v555 = vor.u32 %v553, %v551
        %v557 = vshll.u32 %v490, 16
        %v559 = vrot.slane %v557, 1
        %v560 = vsel %vm508, %v555, %v559
        %v561 = vshrl.u32 %v490, 16
        %v563 = vor.u32 %v561, %v559
        %v565 = vshll.u32 %v491, 16
        %v567 = vrot.slane %v565, 1
        %v568 = vsel %vm508, %v563, %v567
        %v569 = vshrl.u32 %v491, 16
        %v571 = vor.u32 %v569, %v567
        %v573 = vshll.u32 %v492, 16
        %v575 = vrot.slane %v573, 1
        %v576 = vsel %vm508, %v571, %v575
        %v577 = vshrl.u32 %v492, 16
        %v579 = vor.u32 %v577, %v575
        %v581 = vshll.u32 %v505, 16
        %v583 = vrot.slane %v581, 1
        %v584 = vsel %vm508, %v579, %v583
        %585 = vrot.lane.b32.xlu0 %v520, 4
        %v586 = vpop.permute.xlu0 %585
        %587 = vrot.lane.b32.xlu0 %v528, 4
        %v588 = vpop.permute.xlu0 %587
        %589 = vrot.lane.b32.xlu0 %v536, 4
        %v590 = vpop.permute.xlu0 %589
        %591 = vrot.lane.b32.xlu0 %v544, 4
        %v592 = vpop.permute.xlu0 %591
        %593 = vrot.lane.b32.xlu0 %v552, 4
        %v594 = vpop.permute.xlu0 %593
        %595 = vrot.lane.b32.xlu0 %v560, 4
        %v596 = vpop.permute.xlu0 %595
        %597 = vrot.lane.b32.xlu0 %v568, 4
        %v598 = vpop.permute.xlu0 %597
        %599 = vrot.lane.b32.xlu0 %v576, 4
        %v600 = vpop.permute.xlu0 %599
        %601 = vrot.lane.b32.xlu0 %v584, 4
        %v602 = vpop.permute.xlu0 %601
        %vm603 = vcmask 1046528
        %v604 = vrot.slane %v484, 1
        %v605 = vrot.slane %v485, 1
        %v606 = vsel %vm603, %v604, %v605
        %v607 = vrot.slane %v486, 1
        %v608 = vsel %vm603, %v605, %v607
        %v609 = vrot.slane %v487, 1
        %v610 = vsel %vm603, %v607, %v609
        %v611 = vrot.slane %v488, 1
        %v612 = vsel %vm603, %v609, %v611
        %v613 = vrot.slane %v489, 1
        %v614 = vsel %vm603, %v611, %v613
        %v615 = vrot.slane %v490, 1
        %v616 = vsel %vm603, %v613, %v615
        %v617 = vrot.slane %v491, 1
        %v618 = vsel %vm603, %v615, %v617
        %v619 = vrot.slane %v492, 1
        %v620 = vsel %vm603, %v617, %v619
        %v621 = vrot.slane %v505, 1
        %v622 = vsel %vm603, %v619, %v621
        %623 = vrot.lane.b32.xlu0 %v606, 8
        %v624 = vpop.permute.xlu0 %623
        %625 = vrot.lane.b32.xlu0 %v608, 8
        %v626 = vpop.permute.xlu0 %625
        %627 = vrot.lane.b32.xlu0 %v610, 8
        %v628 = vpop.permute.xlu0 %627
        %629 = vrot.lane.b32.xlu0 %v612, 8
        %v630 = vpop.permute.xlu0 %629
        %631 = vrot.lane.b32.xlu0 %v614, 8
        %v632 = vpop.permute.xlu0 %631
        %633 = vrot.lane.b32.xlu0 %v616, 8
        %v634 = vpop.permute.xlu0 %633
        %635 = vrot.lane.b32.xlu0 %v618, 8
        %v636 = vpop.permute.xlu0 %635
        %637 = vrot.lane.b32.xlu0 %v620, 8
        %v638 = vpop.permute.xlu0 %637
        %639 = vrot.lane.b32.xlu0 %v622, 8
        %v640 = vpop.permute.xlu0 %639
        %v641 = vrot.slane %v506, 1
        %v642 = vsel %vm603, %v621, %v641
        %643 = vrot.lane.b32.xlu0 %v608, 12
        %v644 = vpop.permute.xlu0 %643
        %645 = vrot.lane.b32.xlu0 %v610, 12
        %v646 = vpop.permute.xlu0 %645
        %647 = vrot.lane.b32.xlu0 %v612, 12
        %v648 = vpop.permute.xlu0 %647
        %649 = vrot.lane.b32.xlu0 %v614, 12
        %v650 = vpop.permute.xlu0 %649
        %651 = vrot.lane.b32.xlu0 %v616, 12
        %v652 = vpop.permute.xlu0 %651
        %653 = vrot.lane.b32.xlu0 %v618, 12
        %v654 = vpop.permute.xlu0 %653
        %655 = vrot.lane.b32.xlu0 %v620, 12
        %v656 = vpop.permute.xlu0 %655
        %657 = vrot.lane.b32.xlu0 %v622, 12
        %v658 = vpop.permute.xlu0 %657
        %659 = vrot.lane.b32.xlu0 %v642, 12
        %v660 = vpop.permute.xlu0 %659
        %vm661 = vsmask.f32 6400
        %v662 = vrot.slane %v521, 1
        %v663 = vrot.slane %v517, 2
        %v664 = vor.u32 %v662, %v663
        %v665 = vrot.slane %v529, 1
        %v666 = vrot.slane %v525, 2
        %v667 = vor.u32 %v665, %v666
        %v668 = vsel %vm661, %v664, %v667
        %v669 = vrot.slane %v537, 1
        %v670 = vrot.slane %v533, 2
        %v671 = vor.u32 %v669, %v670
        %v672 = vsel %vm661, %v667, %v671
        %v673 = vrot.slane %v545, 1
        %v674 = vrot.slane %v541, 2
        %v675 = vor.u32 %v673, %v674
        %v676 = vsel %vm661, %v671, %v675
        %v677 = vrot.slane %v553, 1
        %v678 = vrot.slane %v549, 2
        %v679 = vor.u32 %v677, %v678
        %v680 = vsel %vm661, %v675, %v679
        %v681 = vrot.slane %v561, 1
        %v682 = vrot.slane %v557, 2
        %v683 = vor.u32 %v681, %v682
        %v684 = vsel %vm661, %v679, %v683
        %v685 = vrot.slane %v569, 1
        %v686 = vrot.slane %v565, 2
        %v687 = vor.u32 %v685, %v686
        %v688 = vsel %vm661, %v683, %v687
        %v689 = vrot.slane %v577, 1
        %v690 = vrot.slane %v573, 2
        %v691 = vor.u32 %v689, %v690
        %v692 = vsel %vm661, %v687, %v691
        %v693 = vshrl.u32 %v505, 16
        %v695 = vrot.slane %v693, 1
        %v696 = vrot.slane %v581, 2
        %v697 = vor.u32 %v695, %v696
        %v698 = vsel %vm661, %v691, %v697
        %v700 = vshrl.u32 %v506, 16
        %v702 = vrot.slane %v700, 1
        %v703 = vshll.u32 %v506, 16
        %v705 = vrot.slane %v703, 2
        %v706 = vor.u32 %v702, %v705
        %v707 = vsel %vm661, %v697, %v706
        %708 = vrot.lane.b32.xlu0 %v668, 16
        %v709 = vpop.permute.xlu0 %708
        %710 = vrot.lane.b32.xlu0 %v672, 16
        %v711 = vpop.permute.xlu0 %710
        %712 = vrot.lane.b32.xlu0 %v676, 16
        %v713 = vpop.permute.xlu0 %712
        %714 = vrot.lane.b32.xlu0 %v680, 16
        %v715 = vpop.permute.xlu0 %714
        %716 = vrot.lane.b32.xlu0 %v684, 16
        %v717 = vpop.permute.xlu0 %716
        %718 = vrot.lane.b32.xlu0 %v688, 16
        %v719 = vpop.permute.xlu0 %718
        %720 = vrot.lane.b32.xlu0 %v692, 16
        %v721 = vpop.permute.xlu0 %720
        %722 = vrot.lane.b32.xlu0 %v698, 16
        %v723 = vpop.permute.xlu0 %722
        %724 = vrot.lane.b32.xlu0 %v707, 16
        %v725 = vpop.permute.xlu0 %724
        %vm726 = vcmask 1045504
        %v727 = vrot.slane %v485, 2
        %v728 = vrot.slane %v486, 2
        %v729 = vsel %vm726, %v727, %v728
        %v730 = vrot.slane %v487, 2
        %v731 = vsel %vm726, %v728, %v730
        %v732 = vrot.slane %v488, 2
        %v733 = vsel %vm726, %v730, %v732
        %v734 = vrot.slane %v489, 2
        %v735 = vsel %vm726, %v732, %v734
        %v736 = vrot.slane %v490, 2
        %v737 = vsel %vm726, %v734, %v736
        %v738 = vrot.slane %v491, 2
        %v739 = vsel %vm726, %v736, %v738
        %v740 = vrot.slane %v492, 2
        %v741 = vsel %vm726, %v738, %v740
        %v742 = vrot.slane %v505, 2
        %v743 = vsel %vm726, %v740, %v742
        %v744 = vrot.slane %v506, 2
        %v745 = vsel %vm726, %v742, %v744
        %746 = vrot.lane.b32.xlu0 %v729, 20
        %v747 = vpop.permute.xlu0 %746
        %748 = vrot.lane.b32.xlu0 %v731, 20
        %v749 = vpop.permute.xlu0 %748
        %750 = vrot.lane.b32.xlu0 %v733, 20
        %v751 = vpop.permute.xlu0 %750
        %752 = vrot.lane.b32.xlu0 %v735, 20
        %v753 = vpop.permute.xlu0 %752
        %754 = vrot.lane.b32.xlu0 %v737, 20
        %v755 = vpop.permute.xlu0 %754
        %756 = vrot.lane.b32.xlu0 %v739, 20
        %v757 = vpop.permute.xlu0 %756
        %758 = vrot.lane.b32.xlu0 %v741, 20
        %v759 = vpop.permute.xlu0 %758
        %760 = vrot.lane.b32.xlu0 %v743, 20
        %v761 = vpop.permute.xlu0 %760
        %762 = vrot.lane.b32.xlu0 %v745, 20
        %v763 = vpop.permute.xlu0 %762
        %v764 = vrot.slane %v507, 2
        %v765 = vsel %vm726, %v744, %v764
        %766 = vrot.lane.b32.xlu0 %v731, 24
        %v767 = vpop.permute.xlu0 %766
        %768 = vrot.lane.b32.xlu0 %v733, 24
        %v769 = vpop.permute.xlu0 %768
        %770 = vrot.lane.b32.xlu0 %v735, 24
        %v771 = vpop.permute.xlu0 %770
        %772 = vrot.lane.b32.xlu0 %v737, 24
        %v773 = vpop.permute.xlu0 %772
        %774 = vrot.lane.b32.xlu0 %v739, 24
        %v775 = vpop.permute.xlu0 %774
        %776 = vrot.lane.b32.xlu0 %v741, 24
        %v777 = vpop.permute.xlu0 %776
        %778 = vrot.lane.b32.xlu0 %v743, 24
        %v779 = vpop.permute.xlu0 %778
        %780 = vrot.lane.b32.xlu0 %v745, 24
        %v781 = vpop.permute.xlu0 %780
        %782 = vrot.lane.b32.xlu0 %v765, 24
        %v783 = vpop.permute.xlu0 %782
        %vm784 = vsmask.f32 5376
        %v785 = vrot.slane %v529, 2
        %v786 = vrot.slane %v525, 3
        %v787 = vor.u32 %v785, %v786
        %v788 = vrot.slane %v537, 2
        %v789 = vrot.slane %v533, 3
        %v790 = vor.u32 %v788, %v789
        %v791 = vsel %vm784, %v787, %v790
        %v792 = vrot.slane %v545, 2
        %v793 = vrot.slane %v541, 3
        %v794 = vor.u32 %v792, %v793
        %v795 = vsel %vm784, %v790, %v794
        %v796 = vrot.slane %v553, 2
        %v797 = vrot.slane %v549, 3
        %v798 = vor.u32 %v796, %v797
        %v799 = vsel %vm784, %v794, %v798
        %v800 = vrot.slane %v561, 2
        %v801 = vrot.slane %v557, 3
        %v802 = vor.u32 %v800, %v801
        %v803 = vsel %vm784, %v798, %v802
        %v804 = vrot.slane %v569, 2
        %v805 = vrot.slane %v565, 3
        %v806 = vor.u32 %v804, %v805
        %v807 = vsel %vm784, %v802, %v806
        %v808 = vrot.slane %v577, 2
        %v809 = vrot.slane %v573, 3
        %v810 = vor.u32 %v808, %v809
        %v811 = vsel %vm784, %v806, %v810
        %v812 = vrot.slane %v693, 2
        %v813 = vrot.slane %v581, 3
        %v814 = vor.u32 %v812, %v813
        %v815 = vsel %vm784, %v810, %v814
        %v816 = vrot.slane %v700, 2
        %v817 = vrot.slane %v703, 3
        %v818 = vor.u32 %v816, %v817
        %v819 = vsel %vm784, %v814, %v818
        %v821 = vshrl.u32 %v507, 16
        %v823 = vrot.slane %v821, 2
        %v824 = vshll.u32 %v507, 16
        %v826 = vrot.slane %v824, 3
        %v827 = vor.u32 %v823, %v826
        %v828 = vsel %vm784, %v818, %v827
        %829 = vrot.lane.b32.xlu0 %v791, 28
        %v830 = vpop.permute.xlu0 %829
        %831 = vrot.lane.b32.xlu0 %v795, 28
        %v832 = vpop.permute.xlu0 %831
        %833 = vrot.lane.b32.xlu0 %v799, 28
        %v834 = vpop.permute.xlu0 %833
        %835 = vrot.lane.b32.xlu0 %v803, 28
        %v836 = vpop.permute.xlu0 %835
        %837 = vrot.lane.b32.xlu0 %v807, 28
        %v838 = vpop.permute.xlu0 %837
        %839 = vrot.lane.b32.xlu0 %v811, 28
        %v840 = vpop.permute.xlu0 %839
        %841 = vrot.lane.b32.xlu0 %v815, 28
        %v842 = vpop.permute.xlu0 %841
        %843 = vrot.lane.b32.xlu0 %v819, 28
        %v844 = vpop.permute.xlu0 %843
        %845 = vrot.lane.b32.xlu0 %v828, 28
        %v846 = vpop.permute.xlu0 %845
        %vm847 = vcmask 1044480
        %v848 = vrot.slane %v486, 3
        %v849 = vrot.slane %v487, 3
        %v850 = vsel %vm847, %v848, %v849
        %v851 = vrot.slane %v488, 3
        %v852 = vsel %vm847, %v849, %v851
        %v853 = vrot.slane %v489, 3
        %v854 = vsel %vm847, %v851, %v853
        %v855 = vrot.slane %v490, 3
        %v856 = vsel %vm847, %v853, %v855
        %v857 = vrot.slane %v491, 3
        %v858 = vsel %vm847, %v855, %v857
        %v859 = vrot.slane %v492, 3
        %v860 = vsel %vm847, %v857, %v859
        %v861 = vrot.slane %v505, 3
        %v862 = vsel %vm847, %v859, %v861
        %v863 = vrot.slane %v506, 3
        %v864 = vsel %vm847, %v861, %v863
        %v865 = vrot.slane %v507, 3
        %v866 = vsel %vm847, %v863, %v865
        %867 = vrot.lane.b32.xlu0 %v850, 32
        %v868 = vpop.permute.xlu0 %867
        %869 = vrot.lane.b32.xlu0 %v852, 32
        %v870 = vpop.permute.xlu0 %869
        %871 = vrot.lane.b32.xlu0 %v854, 32
        %v872 = vpop.permute.xlu0 %871
        %873 = vrot.lane.b32.xlu0 %v856, 32
        %v874 = vpop.permute.xlu0 %873
        %875 = vrot.lane.b32.xlu0 %v858, 32
        %v876 = vpop.permute.xlu0 %875
        %877 = vrot.lane.b32.xlu0 %v860, 32
        %v878 = vpop.permute.xlu0 %877
        %879 = vrot.lane.b32.xlu0 %v862, 32
        %v880 = vpop.permute.xlu0 %879
        %881 = vrot.lane.b32.xlu0 %v864, 32
        %v882 = vpop.permute.xlu0 %881
        %883 = vrot.lane.b32.xlu0 %v866, 32
        %v884 = vpop.permute.xlu0 %883
        %vm885 = vcmask 31744
        %v887 = vsel %vm885, %v484, %v586
        %v889 = vsel %vm885, %v485, %v588
        %v891 = vsel %vm885, %v486, %v590
        %v893 = vsel %vm885, %v487, %v592
        %v895 = vsel %vm885, %v488, %v594
        %v897 = vsel %vm885, %v489, %v596
        %v899 = vsel %vm885, %v490, %v598
        %v901 = vsel %vm885, %v491, %v600
        %v903 = vsel %vm885, %v492, %v602
        %vm904 = vcmask 64512
        %v906 = vsel %vm904, %v887, %v624
        %v908 = vsel %vm904, %v889, %v626
        %v910 = vsel %vm904, %v891, %v628
        %v912 = vsel %vm904, %v893, %v630
        %v914 = vsel %vm904, %v895, %v632
        %v916 = vsel %vm904, %v897, %v634
        %v918 = vsel %vm904, %v899, %v636
        %v920 = vsel %vm904, %v901, %v638
        %v922 = vsel %vm904, %v903, %v640
        %vm923 = vcmask 97280
        %v925 = vsel %vm923, %v906, %v644
        %v927 = vsel %vm923, %v908, %v646
        %v929 = vsel %vm923, %v910, %v648
        %v931 = vsel %vm923, %v912, %v650
        %v933 = vsel %vm923, %v914, %v652
        %v935 = vsel %vm923, %v916, %v654
        %v937 = vsel %vm923, %v918, %v656
        %v939 = vsel %vm923, %v920, %v658
        %v941 = vsel %vm923, %v922, %v660
        %vm942 = vcmask 130048
        %v944 = vsel %vm942, %v925, %v709
        %v946 = vsel %vm942, %v927, %v711
        %v948 = vsel %vm942, %v929, %v713
        %v950 = vsel %vm942, %v931, %v715
        %v952 = vsel %vm942, %v933, %v717
        %v954 = vsel %vm942, %v935, %v719
        %v956 = vsel %vm942, %v937, %v721
        %v958 = vsel %vm942, %v939, %v723
        %v960 = vsel %vm942, %v941, %v725
        %vm961 = vcmask 162816
        %v963 = vsel %vm961, %v944, %v747
        %v965 = vsel %vm961, %v946, %v749
        %v967 = vsel %vm961, %v948, %v751
        %v969 = vsel %vm961, %v950, %v753
        %v971 = vsel %vm961, %v952, %v755
        %v973 = vsel %vm961, %v954, %v757
        %v975 = vsel %vm961, %v956, %v759
        %v977 = vsel %vm961, %v958, %v761
        %v979 = vsel %vm961, %v960, %v763
        %vm980 = vcmask 195584
        %v982 = vsel %vm980, %v963, %v767
        %v984 = vsel %vm980, %v965, %v769
        %v986 = vsel %vm980, %v967, %v771
        %v988 = vsel %vm980, %v969, %v773
        %v990 = vsel %vm980, %v971, %v775
        %v992 = vsel %vm980, %v973, %v777
        %v994 = vsel %vm980, %v975, %v779
        %v996 = vsel %vm980, %v977, %v781
        %v998 = vsel %vm980, %v979, %v783
        %vm999 = vcmask 228352
        %v1001 = vsel %vm999, %v982, %v830
        %v1003 = vsel %vm999, %v984, %v832
        %v1005 = vsel %vm999, %v986, %v834
        %v1007 = vsel %vm999, %v988, %v836
        %v1009 = vsel %vm999, %v990, %v838
        %v1011 = vsel %vm999, %v992, %v840
        %v1013 = vsel %vm999, %v994, %v842
        %v1015 = vsel %vm999, %v996, %v844
        %v1017 = vsel %vm999, %v998, %v846
        %vm1018 = vcmask 261120
        %v1020 = vsel %vm1018, %v1001, %v868
        %v1022 = vsel %vm1018, %v1003, %v870
        %v1024 = vsel %vm1018, %v1005, %v872
        %v1026 = vsel %vm1018, %v1007, %v874
        %v1028 = vsel %vm1018, %v1009, %v876
        %v1030 = vsel %vm1018, %v1011, %v878
        %v1032 = vsel %vm1018, %v1013, %v880
        %v1034 = vsel %vm1018, %v1015, %v882
        %v1036 = vsel %vm1018, %v1017, %v884
        %v1046 = vunpack.c.l.b16 %v1020
        %v1047 = vunpack.c.h.b16 %v1020
        %v1048 = vunpack.c.l.b16 %v1022
        %v1049 = vunpack.c.h.b16 %v1022
        %v1050 = vunpack.c.l.b16 %v1024
        %v1051 = vunpack.c.h.b16 %v1024
        %v1052 = vunpack.c.l.b16 %v1026
        %v1053 = vunpack.c.h.b16 %v1026
        %v1054 = vunpack.c.l.b16 %v1028
        %v1055 = vunpack.c.h.b16 %v1028
        %v1056 = vunpack.c.l.b16 %v1030
        %v1057 = vunpack.c.h.b16 %v1030
        %v1058 = vunpack.c.l.b16 %v1032
        %v1059 = vunpack.c.h.b16 %v1032
        %v1060 = vunpack.c.l.b16 %v1034
        %v1061 = vunpack.c.h.b16 %v1034
        %v1062 = vunpack.c.l.b16 %v1036
        %v1063 = vunpack.c.h.b16 %v1036
        %v1064 = vpack.c.b16 %v1046, %v1046
        %v1065 = vpack.c.b16 %v1047, %v1047
        %v1066 = vpack.c.b16 %v1048, %v1048
        %v1067 = vpack.c.b16 %v1049, %v1049
        %v1068 = vpack.c.b16 %v1050, %v1050
        %v1069 = vpack.c.b16 %v1051, %v1051
        %v1070 = vpack.c.b16 %v1052, %v1052
        %v1071 = vpack.c.b16 %v1053, %v1053
        %v1072 = vpack.c.b16 %v1054, %v1054
        %v1073 = vpack.c.b16 %v1055, %v1055
        %v1074 = vpack.c.b16 %v1056, %v1056
        %v1075 = vpack.c.b16 %v1057, %v1057
        %v1076 = vpack.c.b16 %v1058, %v1058
        %v1077 = vpack.c.b16 %v1059, %v1059
        %v1078 = vpack.c.b16 %v1060, %v1060
        %v1079 = vpack.c.b16 %v1061, %v1061
        %v1080 = vpack.c.b16 %v1062, %v1062
        %v1081 = vpack.c.b16 %v1063, %v1063
        %vm1100 = vcmask 289792
        %1101 = vst.msk [vmem:[#allocation2] sm:$0xf] %vm1100, %v1064
        %1102 = vst.msk [vmem:[#allocation2 + $0x4] sm:$0xf] %vm1100, %v1065
        %1103 = vst.msk [vmem:[#allocation2 + $0x8] sm:$0xf] %vm1100, %v1066
        %1104 = vst.msk [vmem:[#allocation2 + $0xc] sm:$0xf] %vm1100, %v1067
        %1105 = vst.msk [vmem:[#allocation2 + $0x10] sm:$0xf] %vm1100, %v1068
        %1106 = vst.msk [vmem:[#allocation2 + $0x14] sm:$0xf] %vm1100, %v1069
        %1107 = vst.msk [vmem:[#allocation2 + $0x18] sm:$0xf] %vm1100, %v1070
        %1108 = vst.msk [vmem:[#allocation2 + $0x1c] sm:$0xf] %vm1100, %v1071
        %1109 = vst.msk [vmem:[#allocation2 + $0x20] sm:$0xf] %vm1100, %v1072
        %1110 = vst.msk [vmem:[#allocation2 + $0x24] sm:$0xf] %vm1100, %v1073
        %1111 = vst.msk [vmem:[#allocation2 + $0x28] sm:$0xf] %vm1100, %v1074
        %1112 = vst.msk [vmem:[#allocation2 + $0x2c] sm:$0xf] %vm1100, %v1075
        %1113 = vst.msk [vmem:[#allocation2 + $0x30] sm:$0xf] %vm1100, %v1076
        %1114 = vst.msk [vmem:[#allocation2 + $0x34] sm:$0xf] %vm1100, %v1077
        %1115 = vst.msk [vmem:[#allocation2 + $0x38] sm:$0xf] %vm1100, %v1078
        %1116 = vst.msk [vmem:[#allocation2 + $0x3c] sm:$0xf] %vm1100, %v1079
        %1117 = vst.msk [vmem:[#allocation2 + $0x40] sm:$0xf] %vm1100, %v1080
        %1118 = vst.msk [vmem:[#allocation2 + $0x44] sm:$0xf] %vm1100, %v1081
      $region36: #{conv_block_forward.1} parent=31 // pred_fallthru
        _
      %v1119 = vld [vmem:[#allocation2] sm:$0xf]
      %v1120 = vld [vmem:[#allocation2 + $0x4] sm:$0xf]
      %v1121 = vld [vmem:[#allocation2 + $0x8] sm:$0xf]
      %v1122 = vld [vmem:[#allocation2 + $0xc] sm:$0xf]
      %v1123 = vld [vmem:[#allocation2 + $0x10] sm:$0xf]
      %v1124 = vld [vmem:[#allocation2 + $0x14] sm:$0xf]
      %v1125 = vld [vmem:[#allocation2 + $0x18] sm:$0xf]
      %v1126 = vld [vmem:[#allocation2 + $0x1c] sm:$0xf]
      %v1127 = vld [vmem:[#allocation2 + $0x20] sm:$0xf]
      %v1128 = vld [vmem:[#allocation2 + $0x24] sm:$0xf]
      %v1129 = vld [vmem:[#allocation2 + $0x28] sm:$0xf]
      %v1130 = vld [vmem:[#allocation2 + $0x2c] sm:$0xf]
      %v1131 = vld [vmem:[#allocation2 + $0x30] sm:$0xf]
      %v1132 = vld [vmem:[#allocation2 + $0x34] sm:$0xf]
      %v1133 = vld [vmem:[#allocation2 + $0x38] sm:$0xf]
      %v1134 = vld [vmem:[#allocation2 + $0x3c] sm:$0xf]
      %v1135 = vld [vmem:[#allocation2 + $0x40] sm:$0xf]
      %v1136 = vld [vmem:[#allocation2 + $0x44] sm:$0xf]
      %v1137 = vld [vmem:[%s385] sm:$0xf]
      %v1138 = vld [vmem:[%s385 + $0x4] sm:$0xf]
      %v1139 = vld [vmem:[%s385 + $0x8] sm:$0xf]
      %v1140 = vld [vmem:[%s385 + $0xc] sm:$0xf]
      %v1141 = vld [vmem:[%s385 + $0x10] sm:$0x3]
      %v1160 = vunpack.c.l.b16 %v1119
      %v1161 = vunpack.c.l.b16 %v1120
      %v1162 = vunpack.c.l.b16 %v1121
      %v1163 = vunpack.c.l.b16 %v1122
      %v1164 = vunpack.c.l.b16 %v1123
      %v1165 = vunpack.c.l.b16 %v1124
      %v1166 = vunpack.c.l.b16 %v1125
      %v1167 = vunpack.c.l.b16 %v1126
      %v1168 = vunpack.c.l.b16 %v1127
      %v1169 = vunpack.c.l.b16 %v1128
      %v1170 = vunpack.c.l.b16 %v1129
      %v1171 = vunpack.c.l.b16 %v1130
      %v1172 = vunpack.c.l.b16 %v1131
      %v1173 = vunpack.c.l.b16 %v1132
      %v1174 = vunpack.c.l.b16 %v1133
      %v1175 = vunpack.c.l.b16 %v1134
      %v1176 = vunpack.c.l.b16 %v1135
      %v1177 = vunpack.c.l.b16 %v1136
      %v1178 = vpack.c.b16 %v1161, %v1160
      %v1179 = vpack.c.b16 %v1163, %v1162
      %v1180 = vpack.c.b16 %v1165, %v1164
      %v1181 = vpack.c.b16 %v1167, %v1166
      %v1182 = vpack.c.b16 %v1169, %v1168
      %v1183 = vpack.c.b16 %v1171, %v1170
      %v1184 = vpack.c.b16 %v1173, %v1172
      %v1185 = vpack.c.b16 %v1175, %v1174
      %v1186 = vpack.c.b16 %v1177, %v1176
      %v1192 = vunpack.c.l.b16 %v1137
      %v1193 = vunpack.c.l.b16 %v1138
      %v1194 = vunpack.c.l.b16 %v1139
      %v1195 = vunpack.c.l.b16 %v1140
      %v1196 = vunpack.c.l.b16 %v1141
      %v1197 = vpack.c.b16 %v1193, %v1192
      %v1198 = vpack.c.b16 %v1195, %v1194
      %v1199 = vpack.c.b16 %v1196, %v1196
      %vm1202 = vcmask 293888
      %v1204 = vsel %vm1202, %v1178, 0
      %v1207 = vsel %vm1202, %v1179, 0
      %v1210 = vsel %vm1202, %v1180, 0
      %v1213 = vsel %vm1202, %v1181, 0
      %v1216 = vsel %vm1202, %v1182, 0
      %v1219 = vsel %vm1202, %v1183, 0
      %v1222 = vsel %vm1202, %v1184, 0
      %v1225 = vsel %vm1202, %v1185, 0
      %v1228 = vsel %vm1202, %v1186, 0
      %vm1230 = vcmask 1041408
      %v1232 = vsel %vm1230, %v1199, 0
      %1234 = vmatprep.subr.bf16.mxu0 0
      %1235 = vmatpush1.bf16.msra.mxu0 0
      %1236 = vmatprep.subr.bf16.mxu0 0
      %1237 = vmatpush1.bf16.msra.mxu0 0
      %1238 = vmatprep.subr.bf16.mxu0 0
      %1239 = vmatpush1.bf16.msra.mxu0 0
      %1240 = vmatprep.subr.bf16.mxu0 0
      %1241 = vmatpush1.bf16.msra.mxu0 0
      %1242 = vmatprep.subr.bf16.mxu0 0
      %1243 = vmatpush1.bf16.msra.mxu0 0
      %1244 = vmatprep.subr.bf16.mxu0 0
      %1245 = vmatpush1.bf16.msra.mxu0 %v1232
      %1246 = vmatprep.subr.bf16.mxu0 0
      %1247 = vmatpush1.bf16.msra.mxu0 %v1198
      %1248 = vmatprep.subr.bf16.mxu0 0
      %1249 = vmatpush1.bf16.msra.mxu0 %v1197
      %1250 = vmatprep.subr.bf16.mxu0 0
      %1251 = vmatpush2.bf16.msra.mxu0 0
      %1252 = vmatprep.subr.bf16.mxu0 0
      %1253 = vmatpush2.bf16.msra.mxu0 0
      %1254 = vmatprep.subr.bf16.mxu0 0
      %1255 = vmatpush2.bf16.msra.mxu0 0
      %1256 = vmatprep.subr.bf16.mxu0 0
      %1257 = vmatpush2.bf16.msra.mxu0 0
      %1258 = vmatprep.subr.bf16.mxu0 0
      %1259 = vmatpush2.bf16.msra.mxu0 0
      %1260 = vmatprep.subr.bf16.mxu0 0
      %1261 = vmatpush2.bf16.msra.mxu0 0
      %1262 = vmatprep.subr.bf16.mxu0 0
      %1263 = vmatpush2.bf16.msra.mxu0 0
      %1264 = vmatprep.subr.bf16.mxu0 0
      %1265 = vmatpush2.bf16.msra.mxu0 0
      %1266 = vmatprep.mubr.bf16.mxu0 0
      %1267 = vmatmul.mubr.bf16.gmra.mxu0 %v1204
      %v1268 = vpop.f32.mrf.mxu0
      %v1269 = vadd.f32 0.0, %v1268
      %v1270 = vpop.f32.mrf.mxu0
      %v1271 = vpop.f32.mrf.mxu0
      %v1272 = vadd.f32 0.0, %v1271
      %v1273 = vpop.f32.mrf.mxu0
      %1274 = vmatprep.mubr.bf16.mxu0 0
      %1275 = vmatmul.mubr.bf16.gmra.mxu0 %v1207
      %v1276 = vpop.f32.mrf.mxu0
      %v1277 = vadd.f32 0.0, %v1276
      %v1278 = vpop.f32.mrf.mxu0
      %v1279 = vpop.f32.mrf.mxu0
      %v1280 = vadd.f32 0.0, %v1279
      %v1281 = vpop.f32.mrf.mxu0
      %1282 = vmatprep.mubr.bf16.mxu0 0
      %1283 = vmatmul.mubr.bf16.gmra.mxu0 %v1210
      %v1284 = vpop.f32.mrf.mxu0
      %v1285 = vadd.f32 0.0, %v1284
      %v1286 = vpop.f32.mrf.mxu0
      %v1287 = vpop.f32.mrf.mxu0
      %v1288 = vadd.f32 0.0, %v1287
      %v1289 = vpop.f32.mrf.mxu0
      %1290 = vmatprep.mubr.bf16.mxu0 0
      %1291 = vmatmul.mubr.bf16.gmra.mxu0 %v1213
      %v1292 = vpop.f32.mrf.mxu0
      %v1293 = vadd.f32 0.0, %v1292
      %v1294 = vpop.f32.mrf.mxu0
      %v1295 = vpop.f32.mrf.mxu0
      %v1296 = vadd.f32 0.0, %v1295
      %v1297 = vpop.f32.mrf.mxu0
      %1298 = vmatprep.mubr.bf16.mxu0 0
      %1299 = vmatmul.mubr.bf16.gmra.mxu0 %v1216
      %v1300 = vpop.f32.mrf.mxu0
      %v1301 = vadd.f32 0.0, %v1300
      %v1302 = vpop.f32.mrf.mxu0
      %v1303 = vpop.f32.mrf.mxu0
      %v1304 = vadd.f32 0.0, %v1303
      %v1305 = vpop.f32.mrf.mxu0
      %1306 = vmatprep.mubr.bf16.mxu0 0
      %1307 = vmatmul.mubr.bf16.gmra.mxu0 %v1219
      %v1308 = vpop.f32.mrf.mxu0
      %v1309 = vadd.f32 0.0, %v1308
      %v1310 = vpop.f32.mrf.mxu0
      %v1311 = vpop.f32.mrf.mxu0
      %v1312 = vadd.f32 0.0, %v1311
      %v1313 = vpop.f32.mrf.mxu0
      %1314 = vmatprep.mubr.bf16.mxu0 0
      %1315 = vmatmul.mubr.bf16.gmra.mxu0 %v1222
      %v1316 = vpop.f32.mrf.mxu0
      %v1317 = vadd.f32 0.0, %v1316
      %v1318 = vpop.f32.mrf.mxu0
      %v1319 = vpop.f32.mrf.mxu0
      %v1320 = vadd.f32 0.0, %v1319
      %v1321 = vpop.f32.mrf.mxu0
      %1322 = vmatprep.mubr.bf16.mxu0 0
      %1323 = vmatmul.mubr.bf16.gmra.mxu0 %v1225
      %v1324 = vpop.f32.mrf.mxu0
      %v1325 = vadd.f32 0.0, %v1324
      %v1326 = vpop.f32.mrf.mxu0
      %v1327 = vpop.f32.mrf.mxu0
      %v1328 = vadd.f32 0.0, %v1327
      %v1329 = vpop.f32.mrf.mxu0
      %1330 = vmatprep.mubr.bf16.mxu0 0
      %1331 = vmatmul.mubr.bf16.gmra.mxu0 %v1228
      %v1332 = vpop.f32.mrf.mxu0
      %v1333 = vadd.f32 0.0, %v1332
      %v1334 = vpop.f32.mrf.mxu0
      %v1335 = vpop.f32.mrf.mxu0
      %v1336 = vadd.f32 0.0, %v1335
      %v1337 = vpop.f32.mrf.mxu0
      %1338 = vdwg.mxu0
      %v1339 = vpack.c.bf16 %v1272, %v1269
      %v1340 = vpack.c.bf16 %v1280, %v1277
      %v1341 = vpack.c.bf16 %v1288, %v1285
      %v1342 = vpack.c.bf16 %v1296, %v1293
      %v1343 = vpack.c.bf16 %v1304, %v1301
      %v1344 = vpack.c.bf16 %v1312, %v1309
      %v1345 = vpack.c.bf16 %v1320, %v1317
      %v1346 = vpack.c.bf16 %v1328, %v1325
      %v1347 = vpack.c.bf16 %v1336, %v1333
      %v1357 = vunpack.c.l.b16 %v1339
      %v1358 = vunpack.c.h.b16 %v1339
      %v1359 = vunpack.c.l.b16 %v1340
      %v1360 = vunpack.c.h.b16 %v1340
      %v1361 = vunpack.c.l.b16 %v1341
      %v1362 = vunpack.c.h.b16 %v1341
      %v1363 = vunpack.c.l.b16 %v1342
      %v1364 = vunpack.c.h.b16 %v1342
      %v1365 = vunpack.c.l.b16 %v1343
      %v1366 = vunpack.c.h.b16 %v1343
      %v1367 = vunpack.c.l.b16 %v1344
      %v1368 = vunpack.c.h.b16 %v1344
      %v1369 = vunpack.c.l.b16 %v1345
      %v1370 = vunpack.c.h.b16 %v1345
      %v1371 = vunpack.c.l.b16 %v1346
      %v1372 = vunpack.c.h.b16 %v1346
      %v1373 = vunpack.c.l.b16 %v1347
      %v1374 = vunpack.c.h.b16 %v1347
      %v1375 = vpack.c.b16 %v1357, %v1357
      %v1376 = vpack.c.b16 %v1358, %v1358
      %v1377 = vpack.c.b16 %v1359, %v1359
      %v1378 = vpack.c.b16 %v1360, %v1360
      %v1379 = vpack.c.b16 %v1361, %v1361
      %v1380 = vpack.c.b16 %v1362, %v1362
      %v1381 = vpack.c.b16 %v1363, %v1363
      %v1382 = vpack.c.b16 %v1364, %v1364
      %v1383 = vpack.c.b16 %v1365, %v1365
      %v1384 = vpack.c.b16 %v1366, %v1366
      %v1385 = vpack.c.b16 %v1367, %v1367
      %v1386 = vpack.c.b16 %v1368, %v1368
      %v1387 = vpack.c.b16 %v1369, %v1369
      %v1388 = vpack.c.b16 %v1370, %v1370
      %v1389 = vpack.c.b16 %v1371, %v1371
      %v1390 = vpack.c.b16 %v1372, %v1372
      %v1391 = vpack.c.b16 %v1373, %v1373
      %v1392 = vpack.c.b16 %v1374, %v1374
      %1411 = vst [vmem:[%s397] sm:$0xf] %v1375
      %1412 = vst [vmem:[%s397 + $0x4] sm:$0xf] %v1376
      %1413 = vst [vmem:[%s397 + $0x8] sm:$0xf] %v1377
      %1414 = vst [vmem:[%s397 + $0xc] sm:$0xf] %v1378
      %1415 = vst [vmem:[%s397 + $0x10] sm:$0xf] %v1379
      %1416 = vst [vmem:[%s397 + $0x14] sm:$0xf] %v1380
      %1417 = vst [vmem:[%s397 + $0x18] sm:$0xf] %v1381
      %1418 = vst [vmem:[%s397 + $0x1c] sm:$0xf] %v1382
      %1419 = vst [vmem:[%s397 + $0x20] sm:$0xf] %v1383
      %1420 = vst [vmem:[%s397 + $0x24] sm:$0xf] %v1384
      %1421 = vst [vmem:[%s397 + $0x28] sm:$0xf] %v1385
      %1422 = vst [vmem:[%s397 + $0x2c] sm:$0xf] %v1386
      %1423 = vst [vmem:[%s397 + $0x30] sm:$0xf] %v1387
      %1424 = vst [vmem:[%s397 + $0x34] sm:$0xf] %v1388
      %1425 = vst [vmem:[%s397 + $0x38] sm:$0xf] %v1389
      %1426 = vst [vmem:[%s397 + $0x3c] sm:$0xf] %v1390
      %1427 = vst [vmem:[%s397 + $0x40] sm:$0xf] %v1391
      %1428 = vst [vmem:[%s397 + $0x44] sm:$0xf] %v1392
      %s1429 = smul.u32 %s23, 144
      %v1430 = vlaneseq
      %v1431 = vshrl.u32 %v1430, 7
      %v1432 = vadd.s32 %v1431, 8
      %v1433 = vadd.s32 %v1431, 16
      %v1434 = vadd.s32 %v1431, 24
      %v1435 = vadd.s32 %v1431, 32
      %v1436 = vadd.s32 %v1431, 40
      %v1437 = vadd.s32 %v1431, 48
      %v1438 = vadd.s32 %v1431, 56
      %v1439 = vadd.s32 %v1431, 64
      %v1440 = vadd.s32 %v1431, 72
      %v1441 = vadd.s32 %v1431, 80
      %v1442 = vadd.s32 %v1431, 88
      %v1443 = vadd.s32 %v1431, 96
      %v1444 = vadd.s32 %v1431, 104
      %v1445 = vadd.s32 %v1431, 112
      %v1446 = vadd.s32 %v1431, 120
      %v1447 = vadd.s32 %v1431, 128
      %v1448 = vadd.s32 %v1431, 136
      %v1449 = vstv %s1429
      %v1450 = vadd.s32 %v1449, %v1431
      %v1451 = vadd.s32 %v1449, %v1432
      %v1452 = vadd.s32 %v1449, %v1433
      %v1453 = vadd.s32 %v1449, %v1434
      %v1454 = vadd.s32 %v1449, %v1435
      %v1455 = vadd.s32 %v1449, %v1436
      %v1456 = vadd.s32 %v1449, %v1437
      %v1457 = vadd.s32 %v1449, %v1438
      %v1458 = vadd.s32 %v1449, %v1439
      %v1459 = vadd.s32 %v1449, %v1440
      %v1460 = vadd.s32 %v1449, %v1441
      %v1461 = vadd.s32 %v1449, %v1442
      %v1462 = vadd.s32 %v1449, %v1443
      %v1463 = vadd.s32 %v1449, %v1444
      %v1464 = vadd.s32 %v1449, %v1445
      %v1465 = vadd.s32 %v1449, %v1446
      %v1466 = vadd.s32 %v1449, %v1447
      %v1467 = vadd.s32 %v1449, %v1448
      %v1468 = vcvt.s32.f32 %v1450
      %v1469 = vcvt.s32.f32 %v1451
      %v1470 = vcvt.s32.f32 %v1452
      %v1471 = vcvt.s32.f32 %v1453
      %v1472 = vcvt.s32.f32 %v1454
      %v1473 = vcvt.s32.f32 %v1455
      %v1474 = vcvt.s32.f32 %v1456
      %v1475 = vcvt.s32.f32 %v1457
      %v1476 = vcvt.s32.f32 %v1458
      %v1477 = vcvt.s32.f32 %v1459
      %v1478 = vcvt.s32.f32 %v1460
      %v1479 = vcvt.s32.f32 %v1461
      %v1480 = vcvt.s32.f32 %v1462
      %v1481 = vcvt.s32.f32 %v1463
      %v1482 = vcvt.s32.f32 %v1464
      %v1483 = vcvt.s32.f32 %v1465
      %v1484 = vcvt.s32.f32 %v1466
      %v1485 = vcvt.s32.f32 %v1467
      %v1486 = vrcp.pop 18.0
      %v1487 = vmul.f32 %v1468, %v1486
      %v1488 = vmul.f32 %v1469, %v1486
      %v1489 = vmul.f32 %v1470, %v1486
      %v1490 = vmul.f32 %v1471, %v1486
      %v1491 = vmul.f32 %v1472, %v1486
      %v1492 = vmul.f32 %v1473, %v1486
      %v1493 = vmul.f32 %v1474, %v1486
      %v1494 = vmul.f32 %v1475, %v1486
      %v1495 = vmul.f32 %v1476, %v1486
      %v1496 = vmul.f32 %v1477, %v1486
      %v1497 = vmul.f32 %v1478, %v1486
      %v1498 = vmul.f32 %v1479, %v1486
      %v1499 = vmul.f32 %v1480, %v1486
      %v1500 = vmul.f32 %v1481, %v1486
      %v1501 = vmul.f32 %v1482, %v1486
      %v1502 = vmul.f32 %v1483, %v1486
      %v1503 = vmul.f32 %v1484, %v1486
      %v1504 = vmul.f32 %v1485, %v1486
      %v1505 = vcvt.f32.s32.to.zero.pseudo %v1487
      %v1506 = vcvt.f32.s32.to.zero.pseudo %v1488
      %v1507 = vcvt.f32.s32.to.zero.pseudo %v1489
      %v1508 = vcvt.f32.s32.to.zero.pseudo %v1490
      %v1509 = vcvt.f32.s32.to.zero.pseudo %v1491
      %v1510 = vcvt.f32.s32.to.zero.pseudo %v1492
      %v1511 = vcvt.f32.s32.to.zero.pseudo %v1493
      %v1512 = vcvt.f32.s32.to.zero.pseudo %v1494
      %v1513 = vcvt.f32.s32.to.zero.pseudo %v1495
      %v1514 = vcvt.f32.s32.to.zero.pseudo %v1496
      %v1515 = vcvt.f32.s32.to.zero.pseudo %v1497
      %v1516 = vcvt.f32.s32.to.zero.pseudo %v1498
      %v1517 = vcvt.f32.s32.to.zero.pseudo %v1499
      %v1518 = vcvt.f32.s32.to.zero.pseudo %v1500
      %v1519 = vcvt.f32.s32.to.zero.pseudo %v1501
      %v1520 = vcvt.f32.s32.to.zero.pseudo %v1502
      %v1521 = vcvt.f32.s32.to.zero.pseudo %v1503
      %v1522 = vcvt.f32.s32.to.zero.pseudo %v1504
      %v1523 = vmul.u32 %v1505, 18
      %v1524 = vmul.u32 %v1506, 18
      %v1525 = vmul.u32 %v1507, 18
      %v1526 = vmul.u32 %v1508, 18
      %v1527 = vmul.u32 %v1509, 18
      %v1528 = vmul.u32 %v1510, 18
      %v1529 = vmul.u32 %v1511, 18
      %v1530 = vmul.u32 %v1512, 18
      %v1531 = vmul.u32 %v1513, 18
      %v1532 = vmul.u32 %v1514, 18
      %v1533 = vmul.u32 %v1515, 18
      %v1534 = vmul.u32 %v1516, 18
      %v1535 = vmul.u32 %v1517, 18
      %v1536 = vmul.u32 %v1518, 18
      %v1537 = vmul.u32 %v1519, 18
      %v1538 = vmul.u32 %v1520, 18
      %v1539 = vmul.u32 %v1521, 18
      %v1540 = vmul.u32 %v1522, 18
      %v1541 = vsub.s32 %v1450, %v1523
      %v1542 = vsub.s32 %v1451, %v1524
      %v1543 = vsub.s32 %v1452, %v1525
      %v1544 = vsub.s32 %v1453, %v1526
      %v1545 = vsub.s32 %v1454, %v1527
      %v1546 = vsub.s32 %v1455, %v1528
      %v1547 = vsub.s32 %v1456, %v1529
      %v1548 = vsub.s32 %v1457, %v1530
      %v1549 = vsub.s32 %v1458, %v1531
      %v1550 = vsub.s32 %v1459, %v1532
      %v1551 = vsub.s32 %v1460, %v1533
      %v1552 = vsub.s32 %v1461, %v1534
      %v1553 = vsub.s32 %v1462, %v1535
      %v1554 = vsub.s32 %v1463, %v1536
      %v1555 = vsub.s32 %v1464, %v1537
      %v1556 = vsub.s32 %v1465, %v1538
      %v1557 = vsub.s32 %v1466, %v1539
      %v1558 = vsub.s32 %v1467, %v1540
      %vm1559 = vcmp.lt.s32.totalorder %v1541, 16
      %vm1560 = vcmp.lt.s32.totalorder %v1542, 16
      %vm1561 = vcmp.lt.s32.totalorder %v1543, 16
      %vm1562 = vcmp.lt.s32.totalorder %v1544, 16
      %vm1563 = vcmp.lt.s32.totalorder %v1545, 16
      %vm1564 = vcmp.lt.s32.totalorder %v1546, 16
      %vm1565 = vcmp.lt.s32.totalorder %v1547, 16
      %vm1566 = vcmp.lt.s32.totalorder %v1548, 16
      %vm1567 = vcmp.lt.s32.totalorder %v1549, 16
      %vm1568 = vcmp.lt.s32.totalorder %v1550, 16
      %vm1569 = vcmp.lt.s32.totalorder %v1551, 16
      %vm1570 = vcmp.lt.s32.totalorder %v1552, 16
      %vm1571 = vcmp.lt.s32.totalorder %v1553, 16
      %vm1572 = vcmp.lt.s32.totalorder %v1554, 16
      %vm1573 = vcmp.lt.s32.totalorder %v1555, 16
      %vm1574 = vcmp.lt.s32.totalorder %v1556, 16
      %vm1575 = vcmp.lt.s32.totalorder %v1557, 16
      %vm1576 = vcmp.lt.s32.totalorder %v1558, 16
      %vm1577 = vcmp.lt.s32.totalorder %v1450, 288
      %vm1578 = vcmp.lt.s32.totalorder %v1451, 288
      %vm1579 = vcmp.lt.s32.totalorder %v1452, 288
      %vm1580 = vcmp.lt.s32.totalorder %v1453, 288
      %vm1581 = vcmp.lt.s32.totalorder %v1454, 288
      %vm1582 = vcmp.lt.s32.totalorder %v1455, 288
      %vm1583 = vcmp.lt.s32.totalorder %v1456, 288
      %vm1584 = vcmp.lt.s32.totalorder %v1457, 288
      %vm1585 = vcmp.lt.s32.totalorder %v1458, 288
      %vm1586 = vcmp.lt.s32.totalorder %v1459, 288
      %vm1587 = vcmp.lt.s32.totalorder %v1460, 288
      %vm1588 = vcmp.lt.s32.totalorder %v1461, 288
      %vm1589 = vcmp.lt.s32.totalorder %v1462, 288
      %vm1590 = vcmp.lt.s32.totalorder %v1463, 288
      %vm1591 = vcmp.lt.s32.totalorder %v1464, 288
      %vm1592 = vcmp.lt.s32.totalorder %v1465, 288
      %vm1593 = vcmp.lt.s32.totalorder %v1466, 288
      %vm1594 = vcmp.lt.s32.totalorder %v1467, 288
      %vm1595 = vmand %vm1559, %vm1577
      %vm1596 = vmand %vm1560, %vm1578
      %vm1597 = vmand %vm1561, %vm1579
      %vm1598 = vmand %vm1562, %vm1580
      %vm1599 = vmand %vm1563, %vm1581
      %vm1600 = vmand %vm1564, %vm1582
      %vm1601 = vmand %vm1565, %vm1583
      %vm1602 = vmand %vm1566, %vm1584
      %vm1603 = vmand %vm1567, %vm1585
      %vm1604 = vmand %vm1568, %vm1586
      %vm1605 = vmand %vm1569, %vm1587
      %vm1606 = vmand %vm1570, %vm1588
      %vm1607 = vmand %vm1571, %vm1589
      %vm1608 = vmand %vm1572, %vm1590
      %vm1609 = vmand %vm1573, %vm1591
      %vm1610 = vmand %vm1574, %vm1592
      %vm1611 = vmand %vm1575, %vm1593
      %vm1612 = vmand %vm1576, %vm1594
      %v1613 = vsel %vm1595, 1, 0
      %v1614 = vsel %vm1596, 1, 0
      %v1615 = vsel %vm1597, 1, 0
      %v1616 = vsel %vm1598, 1, 0
      %v1617 = vsel %vm1599, 1, 0
      %v1618 = vsel %vm1600, 1, 0
      %v1619 = vsel %vm1601, 1, 0
      %v1620 = vsel %vm1602, 1, 0
      %v1621 = vsel %vm1603, 1, 0
      %v1622 = vsel %vm1604, 1, 0
      %v1623 = vsel %vm1605, 1, 0
      %v1624 = vsel %vm1606, 1, 0
      %v1625 = vsel %vm1607, 1, 0
      %v1626 = vsel %vm1608, 1, 0
      %v1627 = vsel %vm1609, 1, 0
      %v1628 = vsel %vm1610, 1, 0
      %v1629 = vsel %vm1611, 1, 0
      %v1630 = vsel %vm1612, 1, 0
      %v1631 = vcvt.s32.f32 %v1613
      %v1632 = vcvt.s32.f32 %v1614
      %v1633 = vcvt.s32.f32 %v1615
      %v1634 = vcvt.s32.f32 %v1616
      %v1635 = vcvt.s32.f32 %v1617
      %v1636 = vcvt.s32.f32 %v1618
      %v1637 = vcvt.s32.f32 %v1619
      %v1638 = vcvt.s32.f32 %v1620
      %v1639 = vcvt.s32.f32 %v1621
      %v1640 = vcvt.s32.f32 %v1622
      %v1641 = vcvt.s32.f32 %v1623
      %v1642 = vcvt.s32.f32 %v1624
      %v1643 = vcvt.s32.f32 %v1625
      %v1644 = vcvt.s32.f32 %v1626
      %v1645 = vcvt.s32.f32 %v1627
      %v1646 = vcvt.s32.f32 %v1628
      %v1647 = vcvt.s32.f32 %v1629
      %v1648 = vcvt.s32.f32 %v1630
      %v1649 = vmul.f32 %v1269, %v1631
      %v1650 = vmul.f32 %v1272, %v1632
      %v1651 = vmul.f32 %v1277, %v1633
      %v1652 = vmul.f32 %v1280, %v1634
      %v1653 = vmul.f32 %v1285, %v1635
      %v1654 = vmul.f32 %v1288, %v1636
      %v1655 = vmul.f32 %v1293, %v1637
      %v1656 = vmul.f32 %v1296, %v1638
      %v1657 = vmul.f32 %v1301, %v1639
      %v1658 = vmul.f32 %v1304, %v1640
      %v1659 = vmul.f32 %v1309, %v1641
      %v1660 = vmul.f32 %v1312, %v1642
      %v1661 = vmul.f32 %v1317, %v1643
      %v1662 = vmul.f32 %v1320, %v1644
      %v1663 = vmul.f32 %v1325, %v1645
      %v1664 = vmul.f32 %v1328, %v1646
      %v1665 = vmul.f32 %v1333, %v1647
      %v1666 = vmul.f32 %v1336, %v1648
      %v1667 = vadd.f32 %v1649, %v1650
      %v1668 = vadd.f32 %v1667, %v1651
      %v1669 = vadd.f32 %v1668, %v1652
      %v1670 = vadd.f32 %v1669, %v1653
      %v1671 = vadd.f32 %v1670, %v1654
      %v1672 = vadd.f32 %v1671, %v1655
      %v1673 = vadd.f32 %v1672, %v1656
      %v1674 = vadd.f32 %v1673, %v1657
      %v1675 = vadd.f32 %v1674, %v1658
      %v1676 = vadd.f32 %v1675, %v1659
      %v1677 = vadd.f32 %v1676, %v1660
      %v1678 = vadd.f32 %v1677, %v1661
      %v1679 = vadd.f32 %v1678, %v1662
      %v1680 = vadd.f32 %v1679, %v1663
      %v1681 = vadd.f32 %v1680, %v1664
      %v1682 = vadd.f32 %v1681, %v1665
      %v1683 = vadd.f32 %v1682, %v1666
      %v1684 = vrot.slane %v1683, 4
      %v1685 = vadd.f32 %v1683, %v1684
      %v1686 = vrot.slane %v1685, 2
      %v1687 = vadd.f32 %v1685, %v1686
      %v1688 = vrot.slane %v1687, 1
      %v1689 = vadd.f32 %v1687, %v1688
      %1690 = vst [vmem:[%s408] sm:$0x1] %v1689
      %v1691 = vmul.f32 %v1649, %v1649
      %v1692 = vmul.f32 %v1650, %v1650
      %v1693 = vmul.f32 %v1651, %v1651
      %v1694 = vmul.f32 %v1652, %v1652
      %v1695 = vmul.f32 %v1653, %v1653
      %v1696 = vmul.f32 %v1654, %v1654
      %v1697 = vmul.f32 %v1655, %v1655
      %v1698 = vmul.f32 %v1656, %v1656
      %v1699 = vmul.f32 %v1657, %v1657
      %v1700 = vmul.f32 %v1658, %v1658
      %v1701 = vmul.f32 %v1659, %v1659
      %v1702 = vmul.f32 %v1660, %v1660
      %v1703 = vmul.f32 %v1661, %v1661
      %v1704 = vmul.f32 %v1662, %v1662
      %v1705 = vmul.f32 %v1663, %v1663
      %v1706 = vmul.f32 %v1664, %v1664
      %v1707 = vmul.f32 %v1665, %v1665
      %v1708 = vmul.f32 %v1666, %v1666
      %v1709 = vadd.f32 %v1691, %v1692
      %v1710 = vadd.f32 %v1709, %v1693
      %v1711 = vadd.f32 %v1710, %v1694
      %v1712 = vadd.f32 %v1711, %v1695
      %v1713 = vadd.f32 %v1712, %v1696
      %v1714 = vadd.f32 %v1713, %v1697
      %v1715 = vadd.f32 %v1714, %v1698
      %v1716 = vadd.f32 %v1715, %v1699
      %v1717 = vadd.f32 %v1716, %v1700
      %v1718 = vadd.f32 %v1717, %v1701
      %v1719 = vadd.f32 %v1718, %v1702
      %v1720 = vadd.f32 %v1719, %v1703
      %v1721 = vadd.f32 %v1720, %v1704
      %v1722 = vadd.f32 %v1721, %v1705
      %v1723 = vadd.f32 %v1722, %v1706
      %v1724 = vadd.f32 %v1723, %v1707
      %v1725 = vadd.f32 %v1724, %v1708
      %v1726 = vrot.slane %v1725, 4
      %v1727 = vadd.f32 %v1725, %v1726
      %v1728 = vrot.slane %v1727, 2
      %v1729 = vadd.f32 %v1727, %v1728
      %v1730 = vrot.slane %v1729, 1
      %v1731 = vadd.f32 %v1729, %v1730
      %1732 = vst [vmem:[%s418] sm:$0x1] %v1731
      %s1733 = smul.u32 18, %s23
      %p1734 = scmp.lt.s32.totalorder %s22, 1
      %s1735 = scalar_select %p1734, %s22, 1
      %p1736 = scmp.lt.s32.totalorder %s1733, 35
      %s1737 = scalar_select %p1736, %s1733, 35
      %p1738 = scmp.lt.s32.totalorder %s24, 0
      %s1739 = scalar_select %p1738, %s24, 0
      %s1740 = sadd.s32 %s1739, %s1737
      %s1741 = smul.addr %s1735, 36
      %s1742 = sadd.s32 %s1740, %s1741
      %s1743 = smul.addr %s1742, 4
      %s1744 = scalar_lea.vmem %s3, %s1743
      %p1745 = scmp.lt.s32.totalorder %s22, 1
      %s1746 = scalar_select %p1745, %s22, 1
      %p1747 = scmp.lt.s32.totalorder %s23, 1
      %s1748 = scalar_select %p1747, %s23, 1
      %p1749 = scmp.lt.s32.totalorder %s24, 0
      %s1750 = scalar_select %p1749, %s24, 0
      %s1751 = sadd.s32 %s1750, %s1748
      %s1752 = smul.addr %s1746, 2
      %s1753 = sadd.s32 %s1751, %s1752
      %s1754 = scalar_lea.vmem %s4, %s1753
      %p1755 = scmp.lt.s32.totalorder %s22, 1
      %s1756 = scalar_select %p1755, %s22, 1
      %p1757 = scmp.lt.s32.totalorder %s23, 1
      %s1758 = scalar_select %p1757, %s23, 1
      %p1759 = scmp.lt.s32.totalorder %s24, 0
      %s1760 = scalar_select %p1759, %s24, 0
      %s1761 = sadd.s32 %s1760, %s1758
      %s1762 = smul.addr %s1756, 2
      %s1763 = sadd.s32 %s1761, %s1762
      %s1764 = scalar_lea.vmem %s5, %s1763
      // Predicated region
      $region37: #{conv_block_forward.1} parent=31 // pred_check
        %p1765 = pneg %p144
      $region38: #{conv_block_forward.1} parent=31 // pred_check_branch
        %1767 = sbr.rel (%p1765) target = $region40
      $region39: #{conv_block_forward.1} parent=31 // pred_region
        %s1768 = smul.u32 18, %s23
      $region40: #{conv_block_forward.1} parent=31 // pred_fallthru
        _
      // Predicated region
      $region41: #{conv_block_forward.1} parent=31 // pred_check
        %p1769 = pneg %p174
      $region42: #{conv_block_forward.1} parent=31 // pred_check_branch
        %1771 = sbr.rel (%p1769) target = $region44
      $region43: #{conv_block_forward.1} parent=31 // pred_region
        _
      $region44: #{conv_block_forward.1} parent=31 // pred_fallthru
        _
      // Predicated region
      $region45: #{conv_block_forward.1} parent=31 // pred_check
        %p1772 = pneg %p204
      $region46: #{conv_block_forward.1} parent=31 // pred_check_branch
        %1774 = sbr.rel (%p1772) target = $region48
      $region47: #{conv_block_forward.1} parent=31 // pred_region
        _
      $region48: #{conv_block_forward.1} parent=31 // pred_fallthru
        _
    $region32: #{conv_block_forward.1} parent=5 // pred_fallthru
      _
    %p1775 = scmp.le.s32.totalorder 2, %s12
    // Predicated region
    $region49: #{conv_block_forward.1} parent=5 // pred_check
      %p1776 = pneg %p1775
    $region50: #{conv_block_forward.1} parent=5 // pred_check_branch
      %1778 = sbr.rel (%p1776) target = $region52
    $region51: #{conv_block_forward.1} parent=5 // pred_region
      %s1779 = ssub.s32 %s12, 2
      // Predicated region
      $region53: #{conv_block_forward.1} parent=51 // pred_check
        %p1780 = pneg %p150
      $region54: #{conv_block_forward.1} parent=51 // pred_check_branch
        %1782 = sbr.rel (%p1780) target = $region56
      $region55: #{conv_block_forward.1} parent=51 // pred_region
        %s1783 = smul.u32 18, %s26
        %p1784 = scmp.lt.s32.totalorder %s25, 1
        %s1785 = scalar_select %p1784, %s25, 1
        %p1786 = scmp.lt.s32.totalorder %s1783, 35
        %s1787 = scalar_select %p1786, %s1783, 35
        %p1788 = scmp.lt.s32.totalorder %s27, 0
        %s1789 = scalar_select %p1788, %s27, 0
        %s1790 = sadd.s32 %s1789, %s1787
        %s1791 = smul.addr %s1785, 36
        %s1792 = sadd.s32 %s1790, %s1791
        %s1793 = smul.addr %s1792, 4
        %s1794 = scalar_lea.vmem %s3, %s1793
      $region56: #{conv_block_forward.1} parent=51 // pred_fallthru
        _
      // Predicated region
      $region57: #{conv_block_forward.1} parent=51 // pred_check
        %p1795 = pneg %p180
      $region58: #{conv_block_forward.1} parent=51 // pred_check_branch
        %1797 = sbr.rel (%p1795) target = $region60
      $region59: #{conv_block_forward.1} parent=51 // pred_region
        %p1798 = scmp.lt.s32.totalorder %s25, 1
        %s1799 = scalar_select %p1798, %s25, 1
        %p1800 = scmp.lt.s32.totalorder %s26, 1
        %s1801 = scalar_select %p1800, %s26, 1
        %p1802 = scmp.lt.s32.totalorder %s27, 0
        %s1803 = scalar_select %p1802, %s27, 0
        %s1804 = sadd.s32 %s1803, %s1801
        %s1805 = smul.addr %s1799, 2
        %s1806 = sadd.s32 %s1804, %s1805
        %s1807 = scalar_lea.vmem %s4, %s1806
      $region60: #{conv_block_forward.1} parent=51 // pred_fallthru
        _
      // Predicated region
      $region61: #{conv_block_forward.1} parent=51 // pred_check
        %p1808 = pneg %p210
      $region62: #{conv_block_forward.1} parent=51 // pred_check_branch
        %1810 = sbr.rel (%p1808) target = $region64
      $region63: #{conv_block_forward.1} parent=51 // pred_region
        %p1811 = scmp.lt.s32.totalorder %s25, 1
        %s1812 = scalar_select %p1811, %s25, 1
        %p1813 = scmp.lt.s32.totalorder %s26, 1
        %s1814 = scalar_select %p1813, %s26, 1
        %p1815 = scmp.lt.s32.totalorder %s27, 0
        %s1816 = scalar_select %p1815, %s27, 0
        %s1817 = sadd.s32 %s1816, %s1814
        %s1818 = smul.addr %s1812, 2
        %s1819 = sadd.s32 %s1817, %s1818
        %s1820 = scalar_lea.vmem %s5, %s1819
      $region64: #{conv_block_forward.1} parent=51 // pred_fallthru
        _
    $region52: #{conv_block_forward.1} parent=5 // pred_fallthru
      _
  $region6: #{conv_block_forward.1} parent=0 // loop_footer
    %s16 = sadd.s32 1, %s12
  $region7: #{conv_block_forward.1} parent=0 // loop_footer_branch
    %11 = sbr.rel target = $region3
  $region8: #{conv_block_forward.1} parent=0 // loop_exit
    _

</llo_original>
